<compile_context>
chip_gen: v7x
topology: tpu7x:2x2x1
jax: 0.10.0
libtpu: 0.0.40
codegen_flags: <defaults>
</compile_context>

<pallas_src>
import functools

import jax
import jax.numpy as jnp
from jax.experimental import pallas as pl
from jax.experimental.pallas import tpu as pltpu


def encoder_block_kernel(
    x_ref,        # (T, S, D)   f32 input tile (T whole sequences)
    wqkv_ref,     # (D, 3*D)    bf16 packed [Wq | Wk | Wv], Wq pre-scaled by 1/sqrt(Dh)
    bqkv_ref,     # (1, 3*D)    f32 packed  [bq | bk | bv], bq pre-scaled
    wp_ref,       # (D, D)      bf16
    w1_ref,       # (D, Dff)    bf16
    b1_ref,       # (1, Dff)    f32
    w2_ref,       # (Dff, D)    bf16
    biasd_ref,    # (6, D)      f32 rows: [bp, g1, be1, b2, g2, be2]
    o_ref,        # (T, S, D)   f32 output tile
    cat_ref,      # (T*S, D)    f32 VMEM scratch: concatenated head outputs
    *,
    n_heads: int,
    d_head: int,
    seqs_per_tile: int,
    seq: int,
):
    eps = 1e-5
    D = n_heads * d_head
    T, S = seqs_per_tile, seq
    rows = T * S

    x = x_ref[...].reshape(rows, D)                          # leading-dim merge: free

    # --- fused QKV projection for all heads (bf16 MXU inputs, f32 accumulate) ---
    qkv = jnp.dot(x.astype(jnp.bfloat16), wqkv_ref[...],
                  preferred_element_type=jnp.float32) + bqkv_ref[...]   # (rows, 3D) f32

    # --- per-(sequence, head) attention; head outputs written lane-dense into scratch ---
    dn = (((1,), (1,)), ((), ()))   # contract last dims of both: q @ k^T, no explicit transpose
    for t in range(T):
        r0 = t * S
        for h in range(n_heads):
            c = h * d_head
            q = qkv[r0:r0 + S, c:c + d_head]                 # already scaled by 1/sqrt(Dh)
            k = qkv[r0:r0 + S, D + c:D + c + d_head]
            v = qkv[r0:r0 + S, 2 * D + c:2 * D + c + d_head]

            s = jax.lax.dot_general(q.astype(jnp.bfloat16), k.astype(jnp.bfloat16),
                                    dn, preferred_element_type=jnp.float32)   # (Sq, Sk)
            # softmax over torch dim=1 of (B, Sq, Sk)  ==  axis 0 here (query axis)
            m = jnp.max(s, axis=0, keepdims=True)
            e = jnp.exp(s - m)
            w = e * pl.reciprocal(jnp.sum(e, axis=0, keepdims=True), approx=True)

            ho = jnp.dot(w.astype(jnp.bfloat16), v.astype(jnp.bfloat16),
                         preferred_element_type=jnp.float32)                  # (S, Dh)
            cat_ref[r0:r0 + S, c:c + d_head] = ho            # static-offset lane-dense write

    # --- single full-K output projection (replaces per-head tiny-K folds) ---
    cat = cat_ref[...]
    proj = jnp.dot(cat.astype(jnp.bfloat16), wp_ref[...],
                   preferred_element_type=jnp.float32) + biasd_ref[0:1, :]    # + bp

    # --- dropout1 (eval -> identity), LayerNorm1 (no residual with x) ---
    g1 = biasd_ref[1:2, :]
    be1 = biasd_ref[2:3, :]
    mu1 = jnp.mean(proj, axis=-1, keepdims=True)
    var1 = jnp.mean(jnp.square(proj - mu1), axis=-1, keepdims=True)
    ln1 = (proj - mu1) * jax.lax.rsqrt(var1 + eps) * g1 + be1

    # --- feed-forward: fc1 -> relu -> (dropout=id) -> fc2 ---
    h1 = jnp.dot(ln1.astype(jnp.bfloat16), w1_ref[...],
                 preferred_element_type=jnp.float32) + b1_ref[...]
    h1 = jnp.maximum(h1, 0.0)
    ff = jnp.dot(h1.astype(jnp.bfloat16), w2_ref[...],
                 preferred_element_type=jnp.float32) + biasd_ref[3:4, :]

    # --- dropout2 (eval -> identity), LayerNorm2(ln1 + ff) ---
    s2 = ln1 + ff
    g2 = biasd_ref[4:5, :]
    be2 = biasd_ref[5:6, :]
    mu2 = jnp.mean(s2, axis=-1, keepdims=True)
    var2 = jnp.mean(jnp.square(s2 - mu2), axis=-1, keepdims=True)
    out = (s2 - mu2) * jax.lax.rsqrt(var2 + eps) * g2 + be2
    o_ref[...] = out.reshape(T, S, D).astype(o_ref.dtype)


def pack_params(p, n_heads, d_model):
    """Pack per-head params into lane-dense consolidated arrays (weights -> bf16)."""
    d_head = d_model // n_heads
    inv_sqrt_dh = 1.0 / (float(d_head) ** 0.5)

    def flat_w(w):   # (H, D, Dh) -> (D, H*Dh), head-major columns
        return jnp.transpose(w, (1, 0, 2)).reshape(d_model, n_heads * d_head)

    def flat_b(b):   # (H, 1, Dh) -> (1, H*Dh)
        return b.reshape(1, n_heads * d_head)

    # fold the 1/sqrt(Dh) score scale into Wq / bq (one-time host-side transform)
    wq = flat_w(p["wq"]) * inv_sqrt_dh
    bq = flat_b(p["bq"]) * inv_sqrt_dh

    wqkv = jnp.concatenate([wq, flat_w(p["wk"]), flat_w(p["wv"])], axis=-1)      # (D, 3D)
    bqkv = jnp.concatenate([bq, flat_b(p["bk"]), flat_b(p["bv"])], axis=-1)      # (1, 3D) f32
    biasd = jnp.concatenate([p["bp"], p["g1"], p["be1"],
                             p["b2"], p["g2"], p["be2"]], axis=0)                # (6, D) f32

    return (wqkv.astype(jnp.bfloat16), bqkv,
            p["wp"].astype(jnp.bfloat16),
            p["w1"].astype(jnp.bfloat16), p["b1"],
            p["w2"].astype(jnp.bfloat16), biasd)


def encoder_block(x, params, *, n_heads, d_model, d_hidden, seqs_per_tile=None):
    B, S, D = x.shape
    assert D == d_model
    d_head = d_model // n_heads

    if seqs_per_tile is None:
        # Largest divisor of B whose row tile stays <= ~256 rows (bounds per-tile VMEM
        # and keeps the x/o DMA pipelined).  Shrink toward ~128 rows on v7x (64 MiB VMEM).
        seqs_per_tile = 1
        for t in range(1, B + 1):
            if B % t == 0 and t * S <= 256:
                seqs_per_tile = t
    assert B % seqs_per_tile == 0
    grid = (B // seqs_per_tile,)
    rows = seqs_per_tile * S

    weights = pack_params(params, n_heads, d_model)
    wqkv, bqkv, wp, w1, b1, w2, biasd = weights

    kernel = functools.partial(encoder_block_kernel, n_heads=n_heads, d_head=d_head,
                               seqs_per_tile=seqs_per_tile, seq=S)

    def const_spec(a):   # full-extent block, constant index map -> resident across grid steps
        nd = a.ndim
        return pl.BlockSpec(a.shape, lambda i, _nd=nd: (0,) * _nd)

    # VMEM budget: resident weights + per-tile f32 working set + double-buffered I/O tiles.
    weight_bytes = sum(int(a.size) * a.dtype.itemsize for a in weights)
    act_bytes = rows * 4 * (D + 3 * D + 3 * D + d_hidden)       # x, qkv, cat/proj/ln1, h1
    io_bytes = 2 * 2 * rows * D * 4                             # double-buffered x and o tiles
    vmem_limit = int(min(64 << 20,
                         max(32 << 20, 2 * weight_bytes + act_bytes + io_bytes + (2 << 20))))

    out = pl.pallas_call(
        kernel,
        out_shape=jax.ShapeDtypeStruct((B, S, D), jnp.float32),
        grid=grid,
        in_specs=[pl.BlockSpec((seqs_per_tile, S, D), lambda i: (i, 0, 0))]
                 + [const_spec(a) for a in weights],
        out_specs=pl.BlockSpec((seqs_per_tile, S, D), lambda i: (i, 0, 0)),
        scratch_shapes=[pltpu.VMEM((rows, D), jnp.float32)],
        compiler_params=pltpu.CompilerParams(
            dimension_semantics=("parallel",),   # megacore sharding on v7x; harmless on v5e/v6e
            vmem_limit_bytes=vmem_limit,
        ),
    )(x, *weights)
    return out


def init_params(key, n_heads, d_model, d_hidden):
    d_head = d_model // n_heads
    ks = jax.random.split(key, 12)
    scale = 0.05
    p = {
        # per-head projection weights stored already transposed: (H, D_in, D_out)
        "wq": scale * jax.random.normal(ks[0], (n_heads, d_model, d_head), jnp.float32),
        "bq": scale * jax.random.normal(ks[1], (n_heads, 1, d_head), jnp.float32),
        "wk": scale * jax.random.normal(ks[2], (n_heads, d_model, d_head), jnp.float32),
        "bk": scale * jax.random.normal(ks[3], (n_heads, 1, d_head), jnp.float32),
        "wv": scale * jax.random.normal(ks[4], (n_heads, d_model, d_head), jnp.float32),
        "bv": scale * jax.random.normal(ks[5], (n_heads, 1, d_head), jnp.float32),
        "wp": scale * jax.random.normal(ks[6], (d_model, d_model), jnp.float32),
        "bp": scale * jax.random.normal(ks[7], (1, d_model), jnp.float32),
        "g1": jnp.ones((1, d_model), jnp.float32),
        "be1": jnp.zeros((1, d_model), jnp.float32),
        "w1": scale * jax.random.normal(ks[8], (d_model, d_hidden), jnp.float32),
        "b1": scale * jax.random.normal(ks[9], (1, d_hidden), jnp.float32),
        "w2": scale * jax.random.normal(ks[10], (d_hidden, d_model), jnp.float32),
        "b2": scale * jax.random.normal(ks[11], (1, d_model), jnp.float32),
        "g2": jnp.ones((1, d_model), jnp.float32),
        "be2": jnp.zeros((1, d_model), jnp.float32),
    }
    return p


def encoder_block_ref(x, p, *, n_heads, d_model, d_hidden):
    """Plain-JAX f32 reference mirroring the PyTorch forward (eval mode)."""
    eps = 1e-5
    d_head = d_model // n_heads
    heads = []
    for h in range(n_heads):
        q = x @ p["wq"][h] + p["bq"][h]
        k = x @ p["wk"][h] + p["bk"][h]
        v = x @ p["wv"][h] + p["bv"][h]
        s = jnp.einsum("bqd,bkd->bqk", q, k) / (d_head ** 0.5)
        w = jax.nn.softmax(s, axis=1)           # torch Softmax(dim=1) -> query axis
        heads.append(jnp.einsum("bqk,bkd->bqd", w, v))
    cat = jnp.concatenate(heads, axis=-1)
    proj = cat @ p["wp"] + p["bp"]

    def ln(z, g, b):
        mu = jnp.mean(z, -1, keepdims=True)
        var = jnp.mean(jnp.square(z - mu), -1, keepdims=True)
        return (z - mu) / jnp.sqrt(var + eps) * g + b

    ln1 = ln(proj, p["g1"], p["be1"])
    ff = jnp.maximum(ln1 @ p["w1"] + p["b1"], 0.0) @ p["w2"] + p["b2"]
    return ln(ln1 + ff, p["g2"], p["be2"])


if __name__ == "__main__":
    n_heads, d_model, d_hidden = 4, 32, 64
    B, S = 2, 8

    key = jax.random.PRNGKey(0)
    kx, kp = jax.random.split(key)
    x = jax.random.normal(kx, (B, S, d_model), jnp.float32)
    params = init_params(kp, n_heads, d_model, d_hidden)

    ref = encoder_block_ref(x, params, n_heads=n_heads, d_model=d_model, d_hidden=d_hidden)

    # auto tile size (all sequences in one tile at this toy size, grid=(1,))
    out_auto = encoder_block(x, params, n_heads=n_heads, d_model=d_model, d_hidden=d_hidden)
    out_auto = jax.block_until_ready(out_auto)
    # explicit one-sequence tiles (grid=(B,)) -> exercises the row-blocked pipeline
    out_tiled = encoder_block(x, params, n_heads=n_heads, d_model=d_model, d_hidden=d_hidden,
                              seqs_per_tile=1)
    out_tiled = jax.block_until_ready(out_tiled)

    assert out_auto.shape == (B, S, d_model)
    # tolerance accounts for bf16 MXU operands and pl.reciprocal(approx=True)
    assert jnp.allclose(out_auto, ref, atol=3e-2, rtol=3e-2), "mismatch vs JAX reference (auto tile)"
    assert jnp.allclose(out_tiled, ref, atol=3e-2, rtol=3e-2), "mismatch vs JAX reference (1-seq tiles)"

    print("KERNEL_OK")
</pallas_src>

<mosaic_0001>
module attributes {stable_mosaic.version = 11 : i64} {
  func.func @encoder_block_kernel(%arg0: i32, %arg1: memref<2x8x32xf32, #tpu.memory_space<vmem>>, %arg2: memref<32x96xbf16, #tpu.memory_space<vmem>>, %arg3: memref<1x96xf32, #tpu.memory_space<vmem>>, %arg4: memref<32x32xbf16, #tpu.memory_space<vmem>>, %arg5: memref<32x64xbf16, #tpu.memory_space<vmem>>, %arg6: memref<1x64xf32, #tpu.memory_space<vmem>>, %arg7: memref<64x32xbf16, #tpu.memory_space<vmem>>, %arg8: memref<6x32xf32, #tpu.memory_space<vmem>>, %arg9: memref<2x8x32xf32, #tpu.memory_space<vmem>>, %arg10: memref<16x32xf32, #tpu.memory_space<vmem>>) attributes {dimension_semantics = [#tpu.dimension_semantics<parallel>], iteration_bounds = array<i64: 1>, scalar_prefetch = 0 : i64, scratch_operands = 1 : i64, tpu.core_type = #tpu.core_type<tc>, window_params = [{transform_indices = @transform_0, window_bounds = array<i64: 2, 8, 32>}, {pipeline_mode = #tpu.pipeline_mode<synchronous>, transform_indices = @transform_1, window_bounds = array<i64: 32, 96>}, {pipeline_mode = #tpu.pipeline_mode<synchronous>, transform_indices = @transform_2, window_bounds = array<i64: 1, 96>}, {pipeline_mode = #tpu.pipeline_mode<synchronous>, transform_indices = @transform_3, window_bounds = array<i64: 32, 32>}, {pipeline_mode = #tpu.pipeline_mode<synchronous>, transform_indices = @transform_4, window_bounds = array<i64: 32, 64>}, {pipeline_mode = #tpu.pipeline_mode<synchronous>, transform_indices = @transform_5, window_bounds = array<i64: 1, 64>}, {pipeline_mode = #tpu.pipeline_mode<synchronous>, transform_indices = @transform_6, window_bounds = array<i64: 64, 32>}, {pipeline_mode = #tpu.pipeline_mode<synchronous>, transform_indices = @transform_7, window_bounds = array<i64: 6, 32>}, {transform_indices = @transform_8, window_bounds = array<i64: 2, 8, 32>}]} {
    %c0 = arith.constant 0 : index
    %c0_0 = arith.constant 0 : index
    %c0_1 = arith.constant 0 : index
    %0 = vector.load %arg1[%c0, %c0_0, %c0_1] : memref<2x8x32xf32, #tpu.memory_space<vmem>>, vector<2x8x32xf32>
    %1 = vector.shape_cast %0 : vector<2x8x32xf32> to vector<16x32xf32>
    %2 = arith.truncf %1 : vector<16x32xf32> to vector<16x32xbf16>
    %c0_2 = arith.constant 0 : index
    %c0_3 = arith.constant 0 : index
    %3 = vector.load %arg2[%c0_2, %c0_3] : memref<32x96xbf16, #tpu.memory_space<vmem>>, vector<32x96xbf16>
    %cst = arith.constant dense<0.000000e+00> : vector<16x96xf32>
    %4 = tpu.matmul %2, %3, %cst {dimension_numbers = #tpu.dot_dimension_numbers<[1], [0], [0], [1], [0, 0, 1, 1], [], []>} : vector<16x32xbf16>, vector<32x96xbf16>, vector<16x96xf32> -> vector<16x96xf32>
    %c0_4 = arith.constant 0 : index
    %c0_5 = arith.constant 0 : index
    %5 = vector.load %arg3[%c0_4, %c0_5] : memref<1x96xf32, #tpu.memory_space<vmem>>, vector<1x96xf32>
    %6 = vector.broadcast %5 : vector<1x96xf32> to vector<16x96xf32>
    %7 = arith.addf %4, %6 : vector<16x96xf32>
    %8 = vector.extract_strided_slice %7 {offsets = [0, 0], sizes = [8, 8], strides = [1, 1]} : vector<16x96xf32> to vector<8x8xf32>
    %9 = vector.extract_strided_slice %7 {offsets = [0, 32], sizes = [8, 8], strides = [1, 1]} : vector<16x96xf32> to vector<8x8xf32>
    %10 = vector.extract_strided_slice %7 {offsets = [0, 64], sizes = [8, 8], strides = [1, 1]} : vector<16x96xf32> to vector<8x8xf32>
    %11 = arith.truncf %8 : vector<8x8xf32> to vector<8x8xbf16>
    %12 = arith.truncf %9 : vector<8x8xf32> to vector<8x8xbf16>
    %cst_6 = arith.constant dense<0.000000e+00> : vector<8x8xf32>
    %13 = tpu.matmul %11, %12, %cst_6 {dimension_numbers = #tpu.dot_dimension_numbers<[1], [1], [0], [0], [0, 0, 1, 0], [], []>} : vector<8x8xbf16>, vector<8x8xbf16>, vector<8x8xf32> -> vector<8x8xf32>
    %cst_7 = arith.constant dense<0xFF800000> : vector<8xf32>
    %14 = vector.multi_reduction <maximumf>, %13, %cst_7 [0] : vector<8x8xf32> to vector<8xf32>
    %15 = vector.shape_cast %14 : vector<8xf32> to vector<1x8xf32>
    %16 = vector.broadcast %15 : vector<1x8xf32> to vector<8x8xf32>
    %17 = arith.subf %13, %16 : vector<8x8xf32>
    %18 = math.exp %17 : vector<8x8xf32>
    %cst_8 = arith.constant dense<0.000000e+00> : vector<8xf32>
    %19 = vector.multi_reduction <add>, %18, %cst_8 [0] : vector<8x8xf32> to vector<8xf32>
    %20 = vector.shape_cast %19 : vector<8xf32> to vector<1x8xf32>
    %21 = tpu.reciprocal %20 {approx = true} : vector<1x8xf32> -> vector<1x8xf32>
    %22 = vector.broadcast %21 : vector<1x8xf32> to vector<8x8xf32>
    %23 = arith.mulf %18, %22 : vector<8x8xf32>
    %24 = arith.truncf %23 : vector<8x8xf32> to vector<8x8xbf16>
    %25 = arith.truncf %10 : vector<8x8xf32> to vector<8x8xbf16>
    %cst_9 = arith.constant dense<0.000000e+00> : vector<8x8xf32>
    %26 = tpu.matmul %24, %25, %cst_9 {dimension_numbers = #tpu.dot_dimension_numbers<[1], [0], [0], [1], [0, 0, 1, 1], [], []>} : vector<8x8xbf16>, vector<8x8xbf16>, vector<8x8xf32> -> vector<8x8xf32>
    %c0_10 = arith.constant 0 : index
    %c0_11 = arith.constant 0 : index
    %27 = vector.load %arg10[%c0_10, %c0_11] : memref<16x32xf32, #tpu.memory_space<vmem>>, vector<8x8xf32>
    tpu.vector_store %arg10[%c0_10, %c0_11], %26 {strides = array<i32>} : memref<16x32xf32, #tpu.memory_space<vmem>>, vector<8x8xf32>,
    %28 = vector.extract_strided_slice %7 {offsets = [0, 8], sizes = [8, 8], strides = [1, 1]} : vector<16x96xf32> to vector<8x8xf32>
    %29 = vector.extract_strided_slice %7 {offsets = [0, 40], sizes = [8, 8], strides = [1, 1]} : vector<16x96xf32> to vector<8x8xf32>
    %30 = vector.extract_strided_slice %7 {offsets = [0, 72], sizes = [8, 8], strides = [1, 1]} : vector<16x96xf32> to vector<8x8xf32>
    %31 = arith.truncf %28 : vector<8x8xf32> to vector<8x8xbf16>
    %32 = arith.truncf %29 : vector<8x8xf32> to vector<8x8xbf16>
    %cst_12 = arith.constant dense<0.000000e+00> : vector<8x8xf32>
    %33 = tpu.matmul %31, %32, %cst_12 {dimension_numbers = #tpu.dot_dimension_numbers<[1], [1], [0], [0], [0, 0, 1, 0], [], []>} : vector<8x8xbf16>, vector<8x8xbf16>, vector<8x8xf32> -> vector<8x8xf32>
    %cst_13 = arith.constant dense<0xFF800000> : vector<8xf32>
    %34 = vector.multi_reduction <maximumf>, %33, %cst_13 [0] : vector<8x8xf32> to vector<8xf32>
    %35 = vector.shape_cast %34 : vector<8xf32> to vector<1x8xf32>
    %36 = vector.broadcast %35 : vector<1x8xf32> to vector<8x8xf32>
    %37 = arith.subf %33, %36 : vector<8x8xf32>
    %38 = math.exp %37 : vector<8x8xf32>
    %cst_14 = arith.constant dense<0.000000e+00> : vector<8xf32>
    %39 = vector.multi_reduction <add>, %38, %cst_14 [0] : vector<8x8xf32> to vector<8xf32>
    %40 = vector.shape_cast %39 : vector<8xf32> to vector<1x8xf32>
    %41 = tpu.reciprocal %40 {approx = true} : vector<1x8xf32> -> vector<1x8xf32>
    %42 = vector.broadcast %41 : vector<1x8xf32> to vector<8x8xf32>
    %43 = arith.mulf %38, %42 : vector<8x8xf32>
    %44 = arith.truncf %43 : vector<8x8xf32> to vector<8x8xbf16>
    %45 = arith.truncf %30 : vector<8x8xf32> to vector<8x8xbf16>
    %cst_15 = arith.constant dense<0.000000e+00> : vector<8x8xf32>
    %46 = tpu.matmul %44, %45, %cst_15 {dimension_numbers = #tpu.dot_dimension_numbers<[1], [0], [0], [1], [0, 0, 1, 1], [], []>} : vector<8x8xbf16>, vector<8x8xbf16>, vector<8x8xf32> -> vector<8x8xf32>
    %c0_16 = arith.constant 0 : index
    %c8 = arith.constant 8 : index
    %47 = vector.load %arg10[%c0_16, %c8] : memref<16x32xf32, #tpu.memory_space<vmem>>, vector<8x8xf32>
    tpu.vector_store %arg10[%c0_16, %c8], %46 {strides = array<i32>} : memref<16x32xf32, #tpu.memory_space<vmem>>, vector<8x8xf32>,
    %48 = vector.extract_strided_slice %7 {offsets = [0, 16], sizes = [8, 8], strides = [1, 1]} : vector<16x96xf32> to vector<8x8xf32>
    %49 = vector.extract_strided_slice %7 {offsets = [0, 48], sizes = [8, 8], strides = [1, 1]} : vector<16x96xf32> to vector<8x8xf32>
    %50 = vector.extract_strided_slice %7 {offsets = [0, 80], sizes = [8, 8], strides = [1, 1]} : vector<16x96xf32> to vector<8x8xf32>
    %51 = arith.truncf %48 : vector<8x8xf32> to vector<8x8xbf16>
    %52 = arith.truncf %49 : vector<8x8xf32> to vector<8x8xbf16>
    %cst_17 = arith.constant dense<0.000000e+00> : vector<8x8xf32>
    %53 = tpu.matmul %51, %52, %cst_17 {dimension_numbers = #tpu.dot_dimension_numbers<[1], [1], [0], [0], [0, 0, 1, 0], [], []>} : vector<8x8xbf16>, vector<8x8xbf16>, vector<8x8xf32> -> vector<8x8xf32>
    %cst_18 = arith.constant dense<0xFF800000> : vector<8xf32>
    %54 = vector.multi_reduction <maximumf>, %53, %cst_18 [0] : vector<8x8xf32> to vector<8xf32>
    %55 = vector.shape_cast %54 : vector<8xf32> to vector<1x8xf32>
    %56 = vector.broadcast %55 : vector<1x8xf32> to vector<8x8xf32>
    %57 = arith.subf %53, %56 : vector<8x8xf32>
    %58 = math.exp %57 : vector<8x8xf32>
    %cst_19 = arith.constant dense<0.000000e+00> : vector<8xf32>
    %59 = vector.multi_reduction <add>, %58, %cst_19 [0] : vector<8x8xf32> to vector<8xf32>
    %60 = vector.shape_cast %59 : vector<8xf32> to vector<1x8xf32>
    %61 = tpu.reciprocal %60 {approx = true} : vector<1x8xf32> -> vector<1x8xf32>
    %62 = vector.broadcast %61 : vector<1x8xf32> to vector<8x8xf32>
    %63 = arith.mulf %58, %62 : vector<8x8xf32>
    %64 = arith.truncf %63 : vector<8x8xf32> to vector<8x8xbf16>
    %65 = arith.truncf %50 : vector<8x8xf32> to vector<8x8xbf16>
    %cst_20 = arith.constant dense<0.000000e+00> : vector<8x8xf32>
    %66 = tpu.matmul %64, %65, %cst_20 {dimension_numbers = #tpu.dot_dimension_numbers<[1], [0], [0], [1], [0, 0, 1, 1], [], []>} : vector<8x8xbf16>, vector<8x8xbf16>, vector<8x8xf32> -> vector<8x8xf32>
    %c0_21 = arith.constant 0 : index
    %c16 = arith.constant 16 : index
    %67 = vector.load %arg10[%c0_21, %c16] : memref<16x32xf32, #tpu.memory_space<vmem>>, vector<8x8xf32>
    tpu.vector_store %arg10[%c0_21, %c16], %66 {strides = array<i32>} : memref<16x32xf32, #tpu.memory_space<vmem>>, vector<8x8xf32>,
    %68 = vector.extract_strided_slice %7 {offsets = [0, 24], sizes = [8, 8], strides = [1, 1]} : vector<16x96xf32> to vector<8x8xf32>
    %69 = vector.extract_strided_slice %7 {offsets = [0, 56], sizes = [8, 8], strides = [1, 1]} : vector<16x96xf32> to vector<8x8xf32>
    %70 = vector.extract_strided_slice %7 {offsets = [0, 88], sizes = [8, 8], strides = [1, 1]} : vector<16x96xf32> to vector<8x8xf32>
    %71 = arith.truncf %68 : vector<8x8xf32> to vector<8x8xbf16>
    %72 = arith.truncf %69 : vector<8x8xf32> to vector<8x8xbf16>
    %cst_22 = arith.constant dense<0.000000e+00> : vector<8x8xf32>
    %73 = tpu.matmul %71, %72, %cst_22 {dimension_numbers = #tpu.dot_dimension_numbers<[1], [1], [0], [0], [0, 0, 1, 0], [], []>} : vector<8x8xbf16>, vector<8x8xbf16>, vector<8x8xf32> -> vector<8x8xf32>
    %cst_23 = arith.constant dense<0xFF800000> : vector<8xf32>
    %74 = vector.multi_reduction <maximumf>, %73, %cst_23 [0] : vector<8x8xf32> to vector<8xf32>
    %75 = vector.shape_cast %74 : vector<8xf32> to vector<1x8xf32>
    %76 = vector.broadcast %75 : vector<1x8xf32> to vector<8x8xf32>
    %77 = arith.subf %73, %76 : vector<8x8xf32>
    %78 = math.exp %77 : vector<8x8xf32>
    %cst_24 = arith.constant dense<0.000000e+00> : vector<8xf32>
    %79 = vector.multi_reduction <add>, %78, %cst_24 [0] : vector<8x8xf32> to vector<8xf32>
    %80 = vector.shape_cast %79 : vector<8xf32> to vector<1x8xf32>
    %81 = tpu.reciprocal %80 {approx = true} : vector<1x8xf32> -> vector<1x8xf32>
    %82 = vector.broadcast %81 : vector<1x8xf32> to vector<8x8xf32>
    %83 = arith.mulf %78, %82 : vector<8x8xf32>
    %84 = arith.truncf %83 : vector<8x8xf32> to vector<8x8xbf16>
    %85 = arith.truncf %70 : vector<8x8xf32> to vector<8x8xbf16>
    %cst_25 = arith.constant dense<0.000000e+00> : vector<8x8xf32>
    %86 = tpu.matmul %84, %85, %cst_25 {dimension_numbers = #tpu.dot_dimension_numbers<[1], [0], [0], [1], [0, 0, 1, 1], [], []>} : vector<8x8xbf16>, vector<8x8xbf16>, vector<8x8xf32> -> vector<8x8xf32>
    %c0_26 = arith.constant 0 : index
    %c24 = arith.constant 24 : index
    %87 = vector.load %arg10[%c0_26, %c24] : memref<16x32xf32, #tpu.memory_space<vmem>>, vector<8x8xf32>
    tpu.vector_store %arg10[%c0_26, %c24], %86 {strides = array<i32>} : memref<16x32xf32, #tpu.memory_space<vmem>>, vector<8x8xf32>,
    %88 = vector.extract_strided_slice %7 {offsets = [8, 0], sizes = [8, 8], strides = [1, 1]} : vector<16x96xf32> to vector<8x8xf32>
    %89 = vector.extract_strided_slice %7 {offsets = [8, 32], sizes = [8, 8], strides = [1, 1]} : vector<16x96xf32> to vector<8x8xf32>
    %90 = vector.extract_strided_slice %7 {offsets = [8, 64], sizes = [8, 8], strides = [1, 1]} : vector<16x96xf32> to vector<8x8xf32>
    %91 = arith.truncf %88 : vector<8x8xf32> to vector<8x8xbf16>
    %92 = arith.truncf %89 : vector<8x8xf32> to vector<8x8xbf16>
    %cst_27 = arith.constant dense<0.000000e+00> : vector<8x8xf32>
    %93 = tpu.matmul %91, %92, %cst_27 {dimension_numbers = #tpu.dot_dimension_numbers<[1], [1], [0], [0], [0, 0, 1, 0], [], []>} : vector<8x8xbf16>, vector<8x8xbf16>, vector<8x8xf32> -> vector<8x8xf32>
    %cst_28 = arith.constant dense<0xFF800000> : vector<8xf32>
    %94 = vector.multi_reduction <maximumf>, %93, %cst_28 [0] : vector<8x8xf32> to vector<8xf32>
    %95 = vector.shape_cast %94 : vector<8xf32> to vector<1x8xf32>
    %96 = vector.broadcast %95 : vector<1x8xf32> to vector<8x8xf32>
    %97 = arith.subf %93, %96 : vector<8x8xf32>
    %98 = math.exp %97 : vector<8x8xf32>
    %cst_29 = arith.constant dense<0.000000e+00> : vector<8xf32>
    %99 = vector.multi_reduction <add>, %98, %cst_29 [0] : vector<8x8xf32> to vector<8xf32>
    %100 = vector.shape_cast %99 : vector<8xf32> to vector<1x8xf32>
    %101 = tpu.reciprocal %100 {approx = true} : vector<1x8xf32> -> vector<1x8xf32>
    %102 = vector.broadcast %101 : vector<1x8xf32> to vector<8x8xf32>
    %103 = arith.mulf %98, %102 : vector<8x8xf32>
    %104 = arith.truncf %103 : vector<8x8xf32> to vector<8x8xbf16>
    %105 = arith.truncf %90 : vector<8x8xf32> to vector<8x8xbf16>
    %cst_30 = arith.constant dense<0.000000e+00> : vector<8x8xf32>
    %106 = tpu.matmul %104, %105, %cst_30 {dimension_numbers = #tpu.dot_dimension_numbers<[1], [0], [0], [1], [0, 0, 1, 1], [], []>} : vector<8x8xbf16>, vector<8x8xbf16>, vector<8x8xf32> -> vector<8x8xf32>
    %c8_31 = arith.constant 8 : index
    %c0_32 = arith.constant 0 : index
    %107 = vector.load %arg10[%c8_31, %c0_32] : memref<16x32xf32, #tpu.memory_space<vmem>>, vector<8x8xf32>
    tpu.vector_store %arg10[%c8_31, %c0_32], %106 {strides = array<i32>} : memref<16x32xf32, #tpu.memory_space<vmem>>, vector<8x8xf32>,
    %108 = vector.extract_strided_slice %7 {offsets = [8, 8], sizes = [8, 8], strides = [1, 1]} : vector<16x96xf32> to vector<8x8xf32>
    %109 = vector.extract_strided_slice %7 {offsets = [8, 40], sizes = [8, 8], strides = [1, 1]} : vector<16x96xf32> to vector<8x8xf32>
    %110 = vector.extract_strided_slice %7 {offsets = [8, 72], sizes = [8, 8], strides = [1, 1]} : vector<16x96xf32> to vector<8x8xf32>
    %111 = arith.truncf %108 : vector<8x8xf32> to vector<8x8xbf16>
    %112 = arith.truncf %109 : vector<8x8xf32> to vector<8x8xbf16>
    %cst_33 = arith.constant dense<0.000000e+00> : vector<8x8xf32>
    %113 = tpu.matmul %111, %112, %cst_33 {dimension_numbers = #tpu.dot_dimension_numbers<[1], [1], [0], [0], [0, 0, 1, 0], [], []>} : vector<8x8xbf16>, vector<8x8xbf16>, vector<8x8xf32> -> vector<8x8xf32>
    %cst_34 = arith.constant dense<0xFF800000> : vector<8xf32>
    %114 = vector.multi_reduction <maximumf>, %113, %cst_34 [0] : vector<8x8xf32> to vector<8xf32>
    %115 = vector.shape_cast %114 : vector<8xf32> to vector<1x8xf32>
    %116 = vector.broadcast %115 : vector<1x8xf32> to vector<8x8xf32>
    %117 = arith.subf %113, %116 : vector<8x8xf32>
    %118 = math.exp %117 : vector<8x8xf32>
    %cst_35 = arith.constant dense<0.000000e+00> : vector<8xf32>
    %119 = vector.multi_reduction <add>, %118, %cst_35 [0] : vector<8x8xf32> to vector<8xf32>
    %120 = vector.shape_cast %119 : vector<8xf32> to vector<1x8xf32>
    %121 = tpu.reciprocal %120 {approx = true} : vector<1x8xf32> -> vector<1x8xf32>
    %122 = vector.broadcast %121 : vector<1x8xf32> to vector<8x8xf32>
    %123 = arith.mulf %118, %122 : vector<8x8xf32>
    %124 = arith.truncf %123 : vector<8x8xf32> to vector<8x8xbf16>
    %125 = arith.truncf %110 : vector<8x8xf32> to vector<8x8xbf16>
    %cst_36 = arith.constant dense<0.000000e+00> : vector<8x8xf32>
    %126 = tpu.matmul %124, %125, %cst_36 {dimension_numbers = #tpu.dot_dimension_numbers<[1], [0], [0], [1], [0, 0, 1, 1], [], []>} : vector<8x8xbf16>, vector<8x8xbf16>, vector<8x8xf32> -> vector<8x8xf32>
    %c8_37 = arith.constant 8 : index
    %c8_38 = arith.constant 8 : index
    %127 = vector.load %arg10[%c8_37, %c8_38] : memref<16x32xf32, #tpu.memory_space<vmem>>, vector<8x8xf32>
    tpu.vector_store %arg10[%c8_37, %c8_38], %126 {strides = array<i32>} : memref<16x32xf32, #tpu.memory_space<vmem>>, vector<8x8xf32>,
    %128 = vector.extract_strided_slice %7 {offsets = [8, 16], sizes = [8, 8], strides = [1, 1]} : vector<16x96xf32> to vector<8x8xf32>
    %129 = vector.extract_strided_slice %7 {offsets = [8, 48], sizes = [8, 8], strides = [1, 1]} : vector<16x96xf32> to vector<8x8xf32>
    %130 = vector.extract_strided_slice %7 {offsets = [8, 80], sizes = [8, 8], strides = [1, 1]} : vector<16x96xf32> to vector<8x8xf32>
    %131 = arith.truncf %128 : vector<8x8xf32> to vector<8x8xbf16>
    %132 = arith.truncf %129 : vector<8x8xf32> to vector<8x8xbf16>
    %cst_39 = arith.constant dense<0.000000e+00> : vector<8x8xf32>
    %133 = tpu.matmul %131, %132, %cst_39 {dimension_numbers = #tpu.dot_dimension_numbers<[1], [1], [0], [0], [0, 0, 1, 0], [], []>} : vector<8x8xbf16>, vector<8x8xbf16>, vector<8x8xf32> -> vector<8x8xf32>
    %cst_40 = arith.constant dense<0xFF800000> : vector<8xf32>
    %134 = vector.multi_reduction <maximumf>, %133, %cst_40 [0] : vector<8x8xf32> to vector<8xf32>
    %135 = vector.shape_cast %134 : vector<8xf32> to vector<1x8xf32>
    %136 = vector.broadcast %135 : vector<1x8xf32> to vector<8x8xf32>
    %137 = arith.subf %133, %136 : vector<8x8xf32>
    %138 = math.exp %137 : vector<8x8xf32>
    %cst_41 = arith.constant dense<0.000000e+00> : vector<8xf32>
    %139 = vector.multi_reduction <add>, %138, %cst_41 [0] : vector<8x8xf32> to vector<8xf32>
    %140 = vector.shape_cast %139 : vector<8xf32> to vector<1x8xf32>
    %141 = tpu.reciprocal %140 {approx = true} : vector<1x8xf32> -> vector<1x8xf32>
    %142 = vector.broadcast %141 : vector<1x8xf32> to vector<8x8xf32>
    %143 = arith.mulf %138, %142 : vector<8x8xf32>
    %144 = arith.truncf %143 : vector<8x8xf32> to vector<8x8xbf16>
    %145 = arith.truncf %130 : vector<8x8xf32> to vector<8x8xbf16>
    %cst_42 = arith.constant dense<0.000000e+00> : vector<8x8xf32>
    %146 = tpu.matmul %144, %145, %cst_42 {dimension_numbers = #tpu.dot_dimension_numbers<[1], [0], [0], [1], [0, 0, 1, 1], [], []>} : vector<8x8xbf16>, vector<8x8xbf16>, vector<8x8xf32> -> vector<8x8xf32>
    %c8_43 = arith.constant 8 : index
    %c16_44 = arith.constant 16 : index
    %147 = vector.load %arg10[%c8_43, %c16_44] : memref<16x32xf32, #tpu.memory_space<vmem>>, vector<8x8xf32>
    tpu.vector_store %arg10[%c8_43, %c16_44], %146 {strides = array<i32>} : memref<16x32xf32, #tpu.memory_space<vmem>>, vector<8x8xf32>,
    %148 = vector.extract_strided_slice %7 {offsets = [8, 24], sizes = [8, 8], strides = [1, 1]} : vector<16x96xf32> to vector<8x8xf32>
    %149 = vector.extract_strided_slice %7 {offsets = [8, 56], sizes = [8, 8], strides = [1, 1]} : vector<16x96xf32> to vector<8x8xf32>
    %150 = vector.extract_strided_slice %7 {offsets = [8, 88], sizes = [8, 8], strides = [1, 1]} : vector<16x96xf32> to vector<8x8xf32>
    %151 = arith.truncf %148 : vector<8x8xf32> to vector<8x8xbf16>
    %152 = arith.truncf %149 : vector<8x8xf32> to vector<8x8xbf16>
    %cst_45 = arith.constant dense<0.000000e+00> : vector<8x8xf32>
    %153 = tpu.matmul %151, %152, %cst_45 {dimension_numbers = #tpu.dot_dimension_numbers<[1], [1], [0], [0], [0, 0, 1, 0], [], []>} : vector<8x8xbf16>, vector<8x8xbf16>, vector<8x8xf32> -> vector<8x8xf32>
    %cst_46 = arith.constant dense<0xFF800000> : vector<8xf32>
    %154 = vector.multi_reduction <maximumf>, %153, %cst_46 [0] : vector<8x8xf32> to vector<8xf32>
    %155 = vector.shape_cast %154 : vector<8xf32> to vector<1x8xf32>
    %156 = vector.broadcast %155 : vector<1x8xf32> to vector<8x8xf32>
    %157 = arith.subf %153, %156 : vector<8x8xf32>
    %158 = math.exp %157 : vector<8x8xf32>
    %cst_47 = arith.constant dense<0.000000e+00> : vector<8xf32>
    %159 = vector.multi_reduction <add>, %158, %cst_47 [0] : vector<8x8xf32> to vector<8xf32>
    %160 = vector.shape_cast %159 : vector<8xf32> to vector<1x8xf32>
    %161 = tpu.reciprocal %160 {approx = true} : vector<1x8xf32> -> vector<1x8xf32>
    %162 = vector.broadcast %161 : vector<1x8xf32> to vector<8x8xf32>
    %163 = arith.mulf %158, %162 : vector<8x8xf32>
    %164 = arith.truncf %163 : vector<8x8xf32> to vector<8x8xbf16>
    %165 = arith.truncf %150 : vector<8x8xf32> to vector<8x8xbf16>
    %cst_48 = arith.constant dense<0.000000e+00> : vector<8x8xf32>
    %166 = tpu.matmul %164, %165, %cst_48 {dimension_numbers = #tpu.dot_dimension_numbers<[1], [0], [0], [1], [0, 0, 1, 1], [], []>} : vector<8x8xbf16>, vector<8x8xbf16>, vector<8x8xf32> -> vector<8x8xf32>
    %c8_49 = arith.constant 8 : index
    %c24_50 = arith.constant 24 : index
    %167 = vector.load %arg10[%c8_49, %c24_50] : memref<16x32xf32, #tpu.memory_space<vmem>>, vector<8x8xf32>
    tpu.vector_store %arg10[%c8_49, %c24_50], %166 {strides = array<i32>} : memref<16x32xf32, #tpu.memory_space<vmem>>, vector<8x8xf32>,
    %c0_51 = arith.constant 0 : index
    %c0_52 = arith.constant 0 : index
    %168 = vector.load %arg10[%c0_51, %c0_52] : memref<16x32xf32, #tpu.memory_space<vmem>>, vector<16x32xf32>
    %169 = arith.truncf %168 : vector<16x32xf32> to vector<16x32xbf16>
    %c0_53 = arith.constant 0 : index
    %c0_54 = arith.constant 0 : index
    %170 = vector.load %arg4[%c0_53, %c0_54] : memref<32x32xbf16, #tpu.memory_space<vmem>>, vector<32x32xbf16>
    %cst_55 = arith.constant dense<0.000000e+00> : vector<16x32xf32>
    %171 = tpu.matmul %169, %170, %cst_55 {dimension_numbers = #tpu.dot_dimension_numbers<[1], [0], [0], [1], [0, 0, 1, 1], [], []>} : vector<16x32xbf16>, vector<32x32xbf16>, vector<16x32xf32> -> vector<16x32xf32>
    %c0_56 = arith.constant 0 : index
    %c0_57 = arith.constant 0 : index
    %172 = vector.load %arg8[%c0_56, %c0_57] : memref<6x32xf32, #tpu.memory_space<vmem>>, vector<1x32xf32>
    %173 = vector.broadcast %172 : vector<1x32xf32> to vector<16x32xf32>
    %174 = arith.addf %171, %173 : vector<16x32xf32>
    %c1 = arith.constant 1 : index
    %c0_58 = arith.constant 0 : index
    %175 = vector.load %arg8[%c1, %c0_58] : memref<6x32xf32, #tpu.memory_space<vmem>>, vector<1x32xf32>
    %c2 = arith.constant 2 : index
    %c0_59 = arith.constant 0 : index
    %176 = vector.load %arg8[%c2, %c0_59] : memref<6x32xf32, #tpu.memory_space<vmem>>, vector<1x32xf32>
    %cst_60 = arith.constant dense<0.000000e+00> : vector<16xf32>
    %177 = vector.multi_reduction <add>, %174, %cst_60 [1] : vector<16x32xf32> to vector<16xf32>
    %178 = vector.shape_cast %177 : vector<16xf32> to vector<16x1xf32>
    %cst_61 = arith.constant 3.200000e+01 : f32
    %179 = vector.broadcast %cst_61 : f32 to vector<16x1xf32>
    %180 = arith.divf %178, %179 : vector<16x1xf32>
    %181 = vector.broadcast %180 : vector<16x1xf32> to vector<16x32xf32>
    %182 = arith.subf %174, %181 : vector<16x32xf32>
    %183 = arith.mulf %182, %182 : vector<16x32xf32>
    %cst_62 = arith.constant dense<0.000000e+00> : vector<16xf32>
    %184 = vector.multi_reduction <add>, %183, %cst_62 [1] : vector<16x32xf32> to vector<16xf32>
    %185 = vector.shape_cast %184 : vector<16xf32> to vector<16x1xf32>
    %cst_63 = arith.constant 3.200000e+01 : f32
    %186 = vector.broadcast %cst_63 : f32 to vector<16x1xf32>
    %187 = arith.divf %185, %186 : vector<16x1xf32>
    %188 = vector.broadcast %180 : vector<16x1xf32> to vector<16x32xf32>
    %189 = arith.subf %174, %188 : vector<16x32xf32>
    %cst_64 = arith.constant 9.99999974E-6 : f32
    %190 = vector.broadcast %cst_64 : f32 to vector<16x1xf32>
    %191 = arith.addf %187, %190 : vector<16x1xf32>
    %192 = math.rsqrt %191 : vector<16x1xf32>
    %193 = vector.broadcast %192 : vector<16x1xf32> to vector<16x32xf32>
    %194 = arith.mulf %189, %193 : vector<16x32xf32>
    %195 = vector.broadcast %175 : vector<1x32xf32> to vector<16x32xf32>
    %196 = arith.mulf %194, %195 : vector<16x32xf32>
    %197 = vector.broadcast %176 : vector<1x32xf32> to vector<16x32xf32>
    %198 = arith.addf %196, %197 : vector<16x32xf32>
    %199 = arith.truncf %198 : vector<16x32xf32> to vector<16x32xbf16>
    %c0_65 = arith.constant 0 : index
    %c0_66 = arith.constant 0 : index
    %200 = vector.load %arg5[%c0_65, %c0_66] : memref<32x64xbf16, #tpu.memory_space<vmem>>, vector<32x64xbf16>
    %cst_67 = arith.constant dense<0.000000e+00> : vector<16x64xf32>
    %201 = tpu.matmul %199, %200, %cst_67 {dimension_numbers = #tpu.dot_dimension_numbers<[1], [0], [0], [1], [0, 0, 1, 1], [], []>} : vector<16x32xbf16>, vector<32x64xbf16>, vector<16x64xf32> -> vector<16x64xf32>
    %c0_68 = arith.constant 0 : index
    %c0_69 = arith.constant 0 : index
    %202 = vector.load %arg6[%c0_68, %c0_69] : memref<1x64xf32, #tpu.memory_space<vmem>>, vector<1x64xf32>
    %203 = vector.broadcast %202 : vector<1x64xf32> to vector<16x64xf32>
    %204 = arith.addf %201, %203 : vector<16x64xf32>
    %cst_70 = arith.constant 0.000000e+00 : f32
    %205 = vector.broadcast %cst_70 : f32 to vector<16x64xf32>
    %206 = arith.maximumf %204, %205 : vector<16x64xf32>
    %207 = arith.truncf %206 : vector<16x64xf32> to vector<16x64xbf16>
    %c0_71 = arith.constant 0 : index
    %c0_72 = arith.constant 0 : index
    %208 = vector.load %arg7[%c0_71, %c0_72] : memref<64x32xbf16, #tpu.memory_space<vmem>>, vector<64x32xbf16>
    %cst_73 = arith.constant dense<0.000000e+00> : vector<16x32xf32>
    %209 = tpu.matmul %207, %208, %cst_73 {dimension_numbers = #tpu.dot_dimension_numbers<[1], [0], [0], [1], [0, 0, 1, 1], [], []>} : vector<16x64xbf16>, vector<64x32xbf16>, vector<16x32xf32> -> vector<16x32xf32>
    %c3 = arith.constant 3 : index
    %c0_74 = arith.constant 0 : index
    %210 = vector.load %arg8[%c3, %c0_74] : memref<6x32xf32, #tpu.memory_space<vmem>>, vector<1x32xf32>
    %211 = vector.broadcast %210 : vector<1x32xf32> to vector<16x32xf32>
    %212 = arith.addf %209, %211 : vector<16x32xf32>
    %213 = arith.addf %198, %212 : vector<16x32xf32>
    %c4 = arith.constant 4 : index
    %c0_75 = arith.constant 0 : index
    %214 = vector.load %arg8[%c4, %c0_75] : memref<6x32xf32, #tpu.memory_space<vmem>>, vector<1x32xf32>
    %c5 = arith.constant 5 : index
    %c0_76 = arith.constant 0 : index
    %215 = vector.load %arg8[%c5, %c0_76] : memref<6x32xf32, #tpu.memory_space<vmem>>, vector<1x32xf32>
    %cst_77 = arith.constant dense<0.000000e+00> : vector<16xf32>
    %216 = vector.multi_reduction <add>, %213, %cst_77 [1] : vector<16x32xf32> to vector<16xf32>
    %217 = vector.shape_cast %216 : vector<16xf32> to vector<16x1xf32>
    %cst_78 = arith.constant 3.200000e+01 : f32
    %218 = vector.broadcast %cst_78 : f32 to vector<16x1xf32>
    %219 = arith.divf %217, %218 : vector<16x1xf32>
    %220 = vector.broadcast %219 : vector<16x1xf32> to vector<16x32xf32>
    %221 = arith.subf %213, %220 : vector<16x32xf32>
    %222 = arith.mulf %221, %221 : vector<16x32xf32>
    %cst_79 = arith.constant dense<0.000000e+00> : vector<16xf32>
    %223 = vector.multi_reduction <add>, %222, %cst_79 [1] : vector<16x32xf32> to vector<16xf32>
    %224 = vector.shape_cast %223 : vector<16xf32> to vector<16x1xf32>
    %cst_80 = arith.constant 3.200000e+01 : f32
    %225 = vector.broadcast %cst_80 : f32 to vector<16x1xf32>
    %226 = arith.divf %224, %225 : vector<16x1xf32>
    %227 = vector.broadcast %219 : vector<16x1xf32> to vector<16x32xf32>
    %228 = arith.subf %213, %227 : vector<16x32xf32>
    %cst_81 = arith.constant 9.99999974E-6 : f32
    %229 = vector.broadcast %cst_81 : f32 to vector<16x1xf32>
    %230 = arith.addf %226, %229 : vector<16x1xf32>
    %231 = math.rsqrt %230 : vector<16x1xf32>
    %232 = vector.broadcast %231 : vector<16x1xf32> to vector<16x32xf32>
    %233 = arith.mulf %228, %232 : vector<16x32xf32>
    %234 = vector.broadcast %214 : vector<1x32xf32> to vector<16x32xf32>
    %235 = arith.mulf %233, %234 : vector<16x32xf32>
    %236 = vector.broadcast %215 : vector<1x32xf32> to vector<16x32xf32>
    %237 = arith.addf %235, %236 : vector<16x32xf32>
    %238 = vector.shape_cast %237 : vector<16x32xf32> to vector<2x8x32xf32>
    %c0_82 = arith.constant 0 : index
    %c0_83 = arith.constant 0 : index
    %c0_84 = arith.constant 0 : index
    %239 = vector.load %arg9[%c0_82, %c0_83, %c0_84] : memref<2x8x32xf32, #tpu.memory_space<vmem>>, vector<2x8x32xf32>
    tpu.vector_store %arg9[%c0_82, %c0_83, %c0_84], %238 {strides = array<i32>} : memref<2x8x32xf32, #tpu.memory_space<vmem>>, vector<2x8x32xf32>,
    return
  }
  func.func @transform_0(%arg0: i32) -> (i32, i32, i32) {
    %c0_i32 = arith.constant 0 : i32
    %c0_i32_0 = arith.constant 0 : i32
    %c0_i32_1 = arith.constant 0 : i32
    return %arg0, %c0_i32, %c0_i32_0 : i32, i32, i32
  }
  func.func @transform_1(%arg0: i32) -> (i32, i32) {
    %c0_i32 = arith.constant 0 : i32
    %c0_i32_0 = arith.constant 0 : i32
    %c0_i32_1 = arith.constant 0 : i32
    return %c0_i32, %c0_i32_0 : i32, i32
  }
  func.func @transform_2(%arg0: i32) -> (i32, i32) {
    %c0_i32 = arith.constant 0 : i32
    %c0_i32_0 = arith.constant 0 : i32
    %c0_i32_1 = arith.constant 0 : i32
    return %c0_i32, %c0_i32_0 : i32, i32
  }
  func.func @transform_3(%arg0: i32) -> (i32, i32) {
    %c0_i32 = arith.constant 0 : i32
    %c0_i32_0 = arith.constant 0 : i32
    %c0_i32_1 = arith.constant 0 : i32
    return %c0_i32, %c0_i32_0 : i32, i32
  }
  func.func @transform_4(%arg0: i32) -> (i32, i32) {
    %c0_i32 = arith.constant 0 : i32
    %c0_i32_0 = arith.constant 0 : i32
    %c0_i32_1 = arith.constant 0 : i32
    return %c0_i32, %c0_i32_0 : i32, i32
  }
  func.func @transform_5(%arg0: i32) -> (i32, i32) {
    %c0_i32 = arith.constant 0 : i32
    %c0_i32_0 = arith.constant 0 : i32
    %c0_i32_1 = arith.constant 0 : i32
    return %c0_i32, %c0_i32_0 : i32, i32
  }
  func.func @transform_6(%arg0: i32) -> (i32, i32) {
    %c0_i32 = arith.constant 0 : i32
    %c0_i32_0 = arith.constant 0 : i32
    %c0_i32_1 = arith.constant 0 : i32
    return %c0_i32, %c0_i32_0 : i32, i32
  }
  func.func @transform_7(%arg0: i32) -> (i32, i32) {
    %c0_i32 = arith.constant 0 : i32
    %c0_i32_0 = arith.constant 0 : i32
    %c0_i32_1 = arith.constant 0 : i32
    return %c0_i32, %c0_i32_0 : i32, i32
  }
  func.func @transform_8(%arg0: i32) -> (i32, i32, i32) {
    %c0_i32 = arith.constant 0 : i32
    %c0_i32_0 = arith.constant 0 : i32
    %c0_i32_1 = arith.constant 0 : i32
    return %arg0, %c0_i32, %c0_i32_0 : i32, i32, i32
  }
}

</mosaic_0001>

<llo_original>
// kernel: tpu_custom_call.1
$region0: #{tpu_custom_call.1}
  #allocation0 [shape = 'u32[]', space=smem, size = 0x4, offset = 0x4, fixed_abs, tag = 'smem constant byte address 0x4 - core index']
  #allocation1 [shape = 'u32[144,128]{1,0:T(1,128)}', space=vmem, size = 0x12000, scoped, tag = 'internal scratch']
  #allocation2 [shape = 'f32[16,32]{1,0:T(8,128)}', space=vmem, size = 0x2000, scoped, tag = 'scratch operand']
  %s0 = inlined_call_operand.vmem [shape: f32[2,8,32], index: 0, kind: input, shape index: {}]
  %s1 = inlined_call_operand.vmem [shape: bf16[32,96], index: 1, kind: input, shape index: {}]
  %s2 = inlined_call_operand.vmem [shape: f32[1,96], index: 2, kind: input, shape index: {}]
  %s3 = inlined_call_operand.vmem [shape: bf16[32,32], index: 3, kind: input, shape index: {}]
  %s4 = inlined_call_operand.hbm [shape: bf16[32,64], index: 4, kind: input, shape index: {}]
  %s5 = inlined_call_operand.vmem [shape: f32[1,64], index: 5, kind: input, shape index: {}]
  %s6 = inlined_call_operand.vmem [shape: bf16[64,32], index: 6, kind: input, shape index: {}]
  %s7 = inlined_call_operand.vmem [shape: f32[6,32], index: 7, kind: input, shape index: {}]
  %s8 = inlined_call_operand.hbm [shape: f32[2,8,32], index: 8, kind: output, shape index: {}]
  %s9 = sld [smem:[#allocation0]]
  $region46: #{tpu_custom_call.1} parent=0
    _
  %s11 = ssub.s32 1, %s9
  %s12 = scalar_select 0, %s11, %s9
  $region1: #{tpu_custom_call.1} parent=0
    #allocation3 [shape = 'u8[8192]{0}', space=vmem, size = 0x2000, scoped, tag = 'input window, operand 4, single buffered']
    #allocation4 [shape = 's32[1]{0}', space=sflag, size = 0x4, scoped, tag = 'scoped memory for tpu_custom_call.1']
    #allocation5 [shape = 's32[1]{0}', space=sflag, size = 0x4, scoped, tag = 'scoped memory for tpu_custom_call.1']
    #allocation6 [shape = 'u8[8192]{0}', space=vmem, size = 0x2000, scoped, tag = 'output window, operand 0, single buffered']
    %13 = vsyncpa [#allocation4], 0
    %14 = vsyncpa [#allocation5], 0
    // Predicated region
    $region2: #{tpu_custom_call.1} parent=1 // pred_check
      _
    $region3: #{tpu_custom_call.1} parent=1 // pred_check_branch
      %16 = sbr.rel (0) target = $region5
    $region4: #{tpu_custom_call.1} parent=1 // pred_region
      _
    $region5: #{tpu_custom_call.1} parent=1 // pred_fallthru
      _
    // Predicated region
    $region6: #{tpu_custom_call.1} parent=1 // pred_check
      _
    $region7: #{tpu_custom_call.1} parent=1 // pred_check_branch
      %18 = sbr.rel (0) target = $region9
    $region8: #{tpu_custom_call.1} parent=1 // pred_region
      _
    $region9: #{tpu_custom_call.1} parent=1 // pred_fallthru
      _
    // Predicated region
    $region10: #{tpu_custom_call.1} parent=1 // pred_check
      _
    $region11: #{tpu_custom_call.1} parent=1 // pred_check_branch
      %20 = sbr.rel (0) target = $region13
    $region12: #{tpu_custom_call.1} parent=1 // pred_region
      _
    $region13: #{tpu_custom_call.1} parent=1 // pred_fallthru
      _
    // Predicated region
    $region14: #{tpu_custom_call.1} parent=1 // pred_check
      _
    $region15: #{tpu_custom_call.1} parent=1 // pred_check_branch
      %22 = sbr.rel (0) target = $region17
    $region16: #{tpu_custom_call.1} parent=1 // pred_region
      _
    $region17: #{tpu_custom_call.1} parent=1 // pred_fallthru
      _
    // Predicated region
    $region18: #{tpu_custom_call.1} parent=1 // pred_check
      _
    $region19: #{tpu_custom_call.1} parent=1 // pred_check_branch
      %24 = sbr.rel (0) target = $region21
    $region20: #{tpu_custom_call.1} parent=1 // pred_region
      %s26 = ssub.s32 256, 256
      %27 = vsyncadd [#allocation4], %s26
      %s28 = sshll.u32 [#allocation3], 4
      %s29 = int_to_ptr.vmem [resolvable:$true] %s28
      %34 = dma.hbm_to_vmem [thread:$0]  %s4, 256, %s29, [#allocation4], 64, 64, 4
    $region21: #{tpu_custom_call.1} parent=1 // pred_fallthru
      _
    // Predicated region
    $region22: #{tpu_custom_call.1} parent=1 // pred_check
      _
    $region23: #{tpu_custom_call.1} parent=1 // pred_check_branch
      %36 = sbr.rel (0) target = $region25
    $region24: #{tpu_custom_call.1} parent=1 // pred_region
      _
    $region25: #{tpu_custom_call.1} parent=1 // pred_fallthru
      _
    // Predicated region
    $region26: #{tpu_custom_call.1} parent=1 // pred_check
      _
    $region27: #{tpu_custom_call.1} parent=1 // pred_check_branch
      %38 = sbr.rel (0) target = $region29
    $region28: #{tpu_custom_call.1} parent=1 // pred_region
      _
    $region29: #{tpu_custom_call.1} parent=1 // pred_fallthru
      _
    // Predicated region
    $region30: #{tpu_custom_call.1} parent=1 // pred_check
      _
    $region31: #{tpu_custom_call.1} parent=1 // pred_check_branch
      %40 = sbr.rel (0) target = $region33
    $region32: #{tpu_custom_call.1} parent=1 // pred_region
      _
    $region33: #{tpu_custom_call.1} parent=1 // pred_fallthru
      _
    // Predicated region
    $region34: #{tpu_custom_call.1} parent=1 // pred_check
      _
    $region35: #{tpu_custom_call.1} parent=1 // pred_check_branch
      %42 = sbr.rel (0) target = $region37
    $region36: #{tpu_custom_call.1} parent=1 // pred_region
      %43 = dma.done [#allocation4], 256
    $region37: #{tpu_custom_call.1} parent=1 // pred_fallthru
      _
    %v45 = vld [vmem:[%s0] sm:$0xff]
    %v46 = vld [vmem:[%s0 + $0x8] sm:$0xff]
    %v47 = vpack.c.bf16 %v46, %v45
    %v48 = vld [vmem:[%s1] sm:$0xf]
    %v49 = vld [vmem:[%s1 + $0x4] sm:$0xf]
    %v50 = vld [vmem:[%s1 + $0x8] sm:$0xf]
    %v51 = vld [vmem:[%s1 + $0xc] sm:$0xf]
    %v52 = vld [vmem:[%s2] sm:$0x1]
    %v54 = vlaneseq
    %v55 = vshrl.u32 %v54, 7
    %v56 = vsub.s32 0, %v55
    %v57 = vrot.slane %v52, %v56
    %v63 = vunpack.c.l.b16 %v48
    %v64 = vunpack.c.l.b16 %v49
    %v65 = vunpack.c.l.b16 %v50
    %v66 = vunpack.c.l.b16 %v51
    %v67 = vpack.c.b16 %v64, %v63
    %v68 = vpack.c.b16 %v66, %v65
    %vm71 = vcmask 261120
    %v73 = vsel %vm71, %v47, 0
    %75 = vmatprep.subr.bf16.mxu0 0
    %76 = vmatpush1.bf16.msra.mxu0 %v67
    %77 = vmatprep.subr.bf16.mxu0 0
    %78 = vmatpush1.bf16.msra.mxu0 %v68
    %79 = vmatprep.subr.bf16.mxu0 0
    %80 = vmatpush1.bf16.msra.mxu0 0
    %81 = vmatprep.subr.bf16.mxu0 0
    %82 = vmatpush1.bf16.msra.mxu0 0
    %83 = vmatprep.subr.bf16.mxu0 0
    %84 = vmatpush1.bf16.msra.mxu0 0
    %85 = vmatprep.subr.bf16.mxu0 0
    %86 = vmatpush1.bf16.msra.mxu0 0
    %87 = vmatprep.subr.bf16.mxu0 0
    %88 = vmatpush1.bf16.msra.mxu0 0
    %89 = vmatprep.subr.bf16.mxu0 0
    %90 = vmatpush1.bf16.msra.mxu0 0
    %91 = vmatprep.subr.bf16.mxu0 0
    %92 = vmatpush1.bf16.msra.mxu0 0
    %93 = vmatprep.subr.bf16.mxu0 0
    %94 = vmatpush1.bf16.msra.mxu0 0
    %95 = vmatprep.subr.bf16.mxu0 0
    %96 = vmatpush1.bf16.msra.mxu0 0
    %97 = vmatprep.subr.bf16.mxu0 0
    %98 = vmatpush1.bf16.msra.mxu0 0
    %99 = vmatprep.subr.bf16.mxu0 0
    %100 = vmatpush1.bf16.msra.mxu0 0
    %101 = vmatprep.subr.bf16.mxu0 0
    %102 = vmatpush1.bf16.msra.mxu0 0
    %103 = vmatprep.subr.bf16.mxu0 0
    %104 = vmatpush1.bf16.msra.mxu0 0
    %105 = vmatprep.subr.bf16.mxu0 0
    %106 = vmatpush1.bf16.msra.mxu0 0
    %107 = vmatprep.mubr.bf16.mxu0 0
    %108 = vmatmul.mubr.bf16.gmra.mrb[0].mxu0 %v73
    %v109 = vpop.f32.mrb[0].mxu0
    %v110 = vadd.f32 %v57, %v109
    %v111 = vpop.f32.mrb[0].mxu0
    %v112 = vpop.f32.mrb[0].mxu0
    %v113 = vadd.f32 %v57, %v112
    %v114 = vpop.f32.mrb[0].mxu0
    %115 = vdwg.mxu0
    %v116 = vpack.c.bf16 %v110, %v110
    %118 = vrot.lane.b32.xlu0 %v116, 96
    %v119 = vpop.permute.xlu0 %118
    %vm120 = vcmask 64512
    %v122 = vsel %vm120, %v116, 0
    %v125 = vsel %vm120, %v119, 0
    %127 = vmatprep.subr.bf16.mxu0 0
    %128 = vmatpush1.bf16.xpose.msra.mxu0 %v125
    %129 = vmatprep.subr.bf16.mxu0 0
    %130 = vmatpush1.bf16.xpose.msra.mxu0 0
    %131 = vmatprep.subr.bf16.mxu0 0
    %132 = vmatpush1.bf16.xpose.msra.mxu0 0
    %133 = vmatprep.subr.bf16.mxu0 0
    %134 = vmatpush1.bf16.xpose.msra.mxu0 0
    %135 = vmatprep.subr.bf16.mxu0 0
    %136 = vmatpush1.bf16.xpose.msra.mxu0 0
    %137 = vmatprep.subr.bf16.mxu0 0
    %138 = vmatpush1.bf16.xpose.msra.mxu0 0
    %139 = vmatprep.subr.bf16.mxu0 0
    %140 = vmatpush1.bf16.xpose.msra.mxu0 0
    %141 = vmatprep.subr.bf16.mxu0 0
    %142 = vmatpush1.bf16.xpose.msra.mxu0 0
    %143 = vmatprep.subr.bf16.mxu0 0
    %144 = vmatpush1.bf16.xpose.msra.mxu0 0
    %145 = vmatprep.subr.bf16.mxu0 0
    %146 = vmatpush1.bf16.xpose.msra.mxu0 0
    %147 = vmatprep.subr.bf16.mxu0 0
    %148 = vmatpush1.bf16.xpose.msra.mxu0 0
    %149 = vmatprep.subr.bf16.mxu0 0
    %150 = vmatpush1.bf16.xpose.msra.mxu0 0
    %151 = vmatprep.subr.bf16.mxu0 0
    %152 = vmatpush1.bf16.xpose.msra.mxu0 0
    %153 = vmatprep.subr.bf16.mxu0 0
    %154 = vmatpush1.bf16.xpose.msra.mxu0 0
    %155 = vmatprep.subr.bf16.mxu0 0
    %156 = vmatpush1.bf16.xpose.msra.mxu0 0
    %157 = vmatprep.subr.bf16.mxu0 0
    %158 = vmatpush1.bf16.xpose.msra.mxu0 0
    %159 = vmatprep.mubr.bf16.mxu0 0
    %160 = vmatmul.mubr.bf16.gmra.mrb[0].mxu0 %v122
    %v161 = vpop.f32.mrb[0].mxu0
    %v162 = vadd.f32 0.0, %v161
    %v163 = vpop.f32.mrb[0].mxu0
    %v164 = vpop.f32.mrb[0].mxu0
    %v165 = vpop.f32.mrb[0].mxu0
    %166 = vdwg.mxu0
    %v167 = vsel %vm120, %v162, -inf
    %v168 = vrot.slane %v167, 4
    %v169 = vmax.f32 %v167, %v168
    %v170 = vrot.slane %v169, 2
    %v171 = vmax.f32 %v169, %v170
    %v172 = vrot.slane %v171, 1
    %v173 = vmax.f32 %v171, %v172
    %v174 = vsub.f32 %v162, %v173
    %v175 = vmul.f32 %v174, 1.442695
    %v176 = vpow.pop %v175
    %v177 = vsel %vm120, %v176, 0.0
    %v178 = vrot.slane %v177, 4
    %v179 = vadd.f32 %v177, %v178
    %v180 = vrot.slane %v179, 2
    %v181 = vadd.f32 %v179, %v180
    %v182 = vrot.slane %v181, 1
    %v183 = vadd.f32 %v181, %v182
    %v184 = vrcp.pop %v183
    %v185 = vmul.f32 %v176, %v184
    %v186 = vpack.c.bf16 %v185, %v185
    %187 = vrot.lane.b32.xlu0 %v116, 64
    %v188 = vpop.permute.xlu0 %187
    %v190 = vsel %vm120, %v186, 0
    %vm192 = vcmask 1043456
    %v194 = vsel %vm192, %v188, 0
    %196 = vmatprep.subr.bf16.mxu0 0
    %197 = vmatpush1.bf16.msra.mxu0 %v194
    %198 = vmatprep.subr.bf16.mxu0 0
    %199 = vmatpush1.bf16.msra.mxu0 0
    %200 = vmatprep.subr.bf16.mxu0 0
    %201 = vmatpush1.bf16.msra.mxu0 0
    %202 = vmatprep.subr.bf16.mxu0 0
    %203 = vmatpush1.bf16.msra.mxu0 0
    %204 = vmatprep.subr.bf16.mxu0 0
    %205 = vmatpush1.bf16.msra.mxu0 0
    %206 = vmatprep.subr.bf16.mxu0 0
    %207 = vmatpush1.bf16.msra.mxu0 0
    %208 = vmatprep.subr.bf16.mxu0 0
    %209 = vmatpush1.bf16.msra.mxu0 0
    %210 = vmatprep.subr.bf16.mxu0 0
    %211 = vmatpush1.bf16.msra.mxu0 0
    %212 = vmatprep.subr.bf16.mxu0 0
    %213 = vmatpush1.bf16.msra.mxu0 0
    %214 = vmatprep.subr.bf16.mxu0 0
    %215 = vmatpush1.bf16.msra.mxu0 0
    %216 = vmatprep.subr.bf16.mxu0 0
    %217 = vmatpush1.bf16.msra.mxu0 0
    %218 = vmatprep.subr.bf16.mxu0 0
    %219 = vmatpush1.bf16.msra.mxu0 0
    %220 = vmatprep.subr.bf16.mxu0 0
    %221 = vmatpush1.bf16.msra.mxu0 0
    %222 = vmatprep.subr.bf16.mxu0 0
    %223 = vmatpush1.bf16.msra.mxu0 0
    %224 = vmatprep.subr.bf16.mxu0 0
    %225 = vmatpush1.bf16.msra.mxu0 0
    %226 = vmatprep.subr.bf16.mxu0 0
    %227 = vmatpush1.bf16.msra.mxu0 0
    %228 = vmatprep.mubr.bf16.mxu0 0
    %229 = vmatmul.mubr.bf16.gmra.mrb[0].mxu0 %v190
    %v230 = vpop.f32.mrb[0].mxu0
    %v231 = vadd.f32 0.0, %v230
    %v232 = vpop.f32.mrb[0].mxu0
    %v233 = vpop.f32.mrb[0].mxu0
    %v234 = vpop.f32.mrb[0].mxu0
    %235 = vdwg.mxu0
    %236 = vst.msk [vmem:[#allocation2] sm:$0xff] %vm120, %v231
    %237 = vrot.lane.b32.xlu0 %v116, 120
    %v238 = vpop.permute.xlu0 %237
    %239 = vrot.lane.b32.xlu0 %v116, 88
    %v240 = vpop.permute.xlu0 %239
    %v242 = vsel %vm120, %v238, 0
    %v245 = vsel %vm120, %v240, 0
    %247 = vmatprep.subr.bf16.mxu0 0
    %248 = vmatpush1.bf16.xpose.msra.mxu0 %v245
    %249 = vmatprep.subr.bf16.mxu0 0
    %250 = vmatpush1.bf16.xpose.msra.mxu0 0
    %251 = vmatprep.subr.bf16.mxu0 0
    %252 = vmatpush1.bf16.xpose.msra.mxu0 0
    %253 = vmatprep.subr.bf16.mxu0 0
    %254 = vmatpush1.bf16.xpose.msra.mxu0 0
    %255 = vmatprep.subr.bf16.mxu0 0
    %256 = vmatpush1.bf16.xpose.msra.mxu0 0
    %257 = vmatprep.subr.bf16.mxu0 0
    %258 = vmatpush1.bf16.xpose.msra.mxu0 0
    %259 = vmatprep.subr.bf16.mxu0 0
    %260 = vmatpush1.bf16.xpose.msra.mxu0 0
    %261 = vmatprep.subr.bf16.mxu0 0
    %262 = vmatpush1.bf16.xpose.msra.mxu0 0
    %263 = vmatprep.subr.bf16.mxu0 0
    %264 = vmatpush1.bf16.xpose.msra.mxu0 0
    %265 = vmatprep.subr.bf16.mxu0 0
    %266 = vmatpush1.bf16.xpose.msra.mxu0 0
    %267 = vmatprep.subr.bf16.mxu0 0
    %268 = vmatpush1.bf16.xpose.msra.mxu0 0
    %269 = vmatprep.subr.bf16.mxu0 0
    %270 = vmatpush1.bf16.xpose.msra.mxu0 0
    %271 = vmatprep.subr.bf16.mxu0 0
    %272 = vmatpush1.bf16.xpose.msra.mxu0 0
    %273 = vmatprep.subr.bf16.mxu0 0
    %274 = vmatpush1.bf16.xpose.msra.mxu0 0
    %275 = vmatprep.subr.bf16.mxu0 0
    %276 = vmatpush1.bf16.xpose.msra.mxu0 0
    %277 = vmatprep.subr.bf16.mxu0 0
    %278 = vmatpush1.bf16.xpose.msra.mxu0 0
    %279 = vmatprep.mubr.bf16.mxu0 0
    %280 = vmatmul.mubr.bf16.gmra.mrb[0].mxu0 %v242
    %v281 = vpop.f32.mrb[0].mxu0
    %v282 = vadd.f32 0.0, %v281
    %v283 = vpop.f32.mrb[0].mxu0
    %v284 = vpop.f32.mrb[0].mxu0
    %v285 = vpop.f32.mrb[0].mxu0
    %286 = vdwg.mxu0
    %v287 = vsel %vm120, %v282, -inf
    %v288 = vrot.slane %v287, 4
    %v289 = vmax.f32 %v287, %v288
    %v290 = vrot.slane %v289, 2
    %v291 = vmax.f32 %v289, %v290
    %v292 = vrot.slane %v291, 1
    %v293 = vmax.f32 %v291, %v292
    %v294 = vsub.f32 %v282, %v293
    %v295 = vmul.f32 %v294, 1.442695
    %v296 = vpow.pop %v295
    %v297 = vsel %vm120, %v296, 0.0
    %v298 = vrot.slane %v297, 4
    %v299 = vadd.f32 %v297, %v298
    %v300 = vrot.slane %v299, 2
    %v301 = vadd.f32 %v299, %v300
    %v302 = vrot.slane %v301, 1
    %v303 = vadd.f32 %v301, %v302
    %v304 = vrcp.pop %v303
    %v305 = vmul.f32 %v296, %v304
    %v306 = vpack.c.bf16 %v305, %v305
    %307 = vrot.lane.b32.xlu0 %v116, 56
    %v308 = vpop.permute.xlu0 %307
    %v310 = vsel %vm120, %v306, 0
    %v313 = vsel %vm192, %v308, 0
    %315 = vmatprep.subr.bf16.mxu0 0
    %316 = vmatpush1.bf16.msra.mxu0 %v313
    %317 = vmatprep.subr.bf16.mxu0 0
    %318 = vmatpush1.bf16.msra.mxu0 0
    %319 = vmatprep.subr.bf16.mxu0 0
    %320 = vmatpush1.bf16.msra.mxu0 0
    %321 = vmatprep.subr.bf16.mxu0 0
    %322 = vmatpush1.bf16.msra.mxu0 0
    %323 = vmatprep.subr.bf16.mxu0 0
    %324 = vmatpush1.bf16.msra.mxu0 0
    %325 = vmatprep.subr.bf16.mxu0 0
    %326 = vmatpush1.bf16.msra.mxu0 0
    %327 = vmatprep.subr.bf16.mxu0 0
    %328 = vmatpush1.bf16.msra.mxu0 0
    %329 = vmatprep.subr.bf16.mxu0 0
    %330 = vmatpush1.bf16.msra.mxu0 0
    %331 = vmatprep.subr.bf16.mxu0 0
    %332 = vmatpush1.bf16.msra.mxu0 0
    %333 = vmatprep.subr.bf16.mxu0 0
    %334 = vmatpush1.bf16.msra.mxu0 0
    %335 = vmatprep.subr.bf16.mxu0 0
    %336 = vmatpush1.bf16.msra.mxu0 0
    %337 = vmatprep.subr.bf16.mxu0 0
    %338 = vmatpush1.bf16.msra.mxu0 0
    %339 = vmatprep.subr.bf16.mxu0 0
    %340 = vmatpush1.bf16.msra.mxu0 0
    %341 = vmatprep.subr.bf16.mxu0 0
    %342 = vmatpush1.bf16.msra.mxu0 0
    %343 = vmatprep.subr.bf16.mxu0 0
    %344 = vmatpush1.bf16.msra.mxu0 0
    %345 = vmatprep.subr.bf16.mxu0 0
    %346 = vmatpush1.bf16.msra.mxu0 0
    %347 = vmatprep.mubr.bf16.mxu0 0
    %348 = vmatmul.mubr.bf16.gmra.mrb[0].mxu0 %v310
    %v349 = vpop.f32.mrb[0].mxu0
    %v350 = vadd.f32 0.0, %v349
    %v351 = vpop.f32.mrb[0].mxu0
    %v352 = vpop.f32.mrb[0].mxu0
    %v353 = vpop.f32.mrb[0].mxu0
    %354 = vdwg.mxu0
    %356 = vrot.lane.b32.xlu0 %v350, 8
    %v357 = vpop.permute.xlu0 %356
    %vm359 = vcmask 130112
    %360 = vst.msk [vmem:[#allocation2] sm:$0xff] %vm359, %v357
    %361 = vrot.lane.b32.xlu0 %v116, 112
    %v362 = vpop.permute.xlu0 %361
    %363 = vrot.lane.b32.xlu0 %v116, 80
    %v364 = vpop.permute.xlu0 %363
    %v366 = vsel %vm120, %v362, 0
    %v369 = vsel %vm120, %v364, 0
    %371 = vmatprep.subr.bf16.mxu0 0
    %372 = vmatpush1.bf16.xpose.msra.mxu0 %v369
    %373 = vmatprep.subr.bf16.mxu0 0
    %374 = vmatpush1.bf16.xpose.msra.mxu0 0
    %375 = vmatprep.subr.bf16.mxu0 0
    %376 = vmatpush1.bf16.xpose.msra.mxu0 0
    %377 = vmatprep.subr.bf16.mxu0 0
    %378 = vmatpush1.bf16.xpose.msra.mxu0 0
    %379 = vmatprep.subr.bf16.mxu0 0
    %380 = vmatpush1.bf16.xpose.msra.mxu0 0
    %381 = vmatprep.subr.bf16.mxu0 0
    %382 = vmatpush1.bf16.xpose.msra.mxu0 0
    %383 = vmatprep.subr.bf16.mxu0 0
    %384 = vmatpush1.bf16.xpose.msra.mxu0 0
    %385 = vmatprep.subr.bf16.mxu0 0
    %386 = vmatpush1.bf16.xpose.msra.mxu0 0
    %387 = vmatprep.subr.bf16.mxu0 0
    %388 = vmatpush1.bf16.xpose.msra.mxu0 0
    %389 = vmatprep.subr.bf16.mxu0 0
    %390 = vmatpush1.bf16.xpose.msra.mxu0 0
    %391 = vmatprep.subr.bf16.mxu0 0
    %392 = vmatpush1.bf16.xpose.msra.mxu0 0
    %393 = vmatprep.subr.bf16.mxu0 0
    %394 = vmatpush1.bf16.xpose.msra.mxu0 0
    %395 = vmatprep.subr.bf16.mxu0 0
    %396 = vmatpush1.bf16.xpose.msra.mxu0 0
    %397 = vmatprep.subr.bf16.mxu0 0
    %398 = vmatpush1.bf16.xpose.msra.mxu0 0
    %399 = vmatprep.subr.bf16.mxu0 0
    %400 = vmatpush1.bf16.xpose.msra.mxu0 0
    %401 = vmatprep.subr.bf16.mxu0 0
    %402 = vmatpush1.bf16.xpose.msra.mxu0 0
    %403 = vmatprep.mubr.bf16.mxu0 0
    %404 = vmatmul.mubr.bf16.gmra.mrb[0].mxu0 %v366
    %v405 = vpop.f32.mrb[0].mxu0
    %v406 = vadd.f32 0.0, %v405
    %v407 = vpop.f32.mrb[0].mxu0
    %v408 = vpop.f32.mrb[0].mxu0
    %v409 = vpop.f32.mrb[0].mxu0
    %410 = vdwg.mxu0
    %v411 = vsel %vm120, %v406, -inf
    %v412 = vrot.slane %v411, 4
    %v413 = vmax.f32 %v411, %v412
    %v414 = vrot.slane %v413, 2
    %v415 = vmax.f32 %v413, %v414
    %v416 = vrot.slane %v415, 1
    %v417 = vmax.f32 %v415, %v416
    %v418 = vsub.f32 %v406, %v417
    %v419 = vmul.f32 %v418, 1.442695
    %v420 = vpow.pop %v419
    %v421 = vsel %vm120, %v420, 0.0
    %v422 = vrot.slane %v421, 4
    %v423 = vadd.f32 %v421, %v422
    %v424 = vrot.slane %v423, 2
    %v425 = vadd.f32 %v423, %v424
    %v426 = vrot.slane %v425, 1
    %v427 = vadd.f32 %v425, %v426
    %v428 = vrcp.pop %v427
    %v429 = vmul.f32 %v420, %v428
    %v430 = vpack.c.bf16 %v429, %v429
    %431 = vrot.lane.b32.xlu0 %v116, 48
    %v432 = vpop.permute.xlu0 %431
    %v434 = vsel %vm120, %v430, 0
    %v437 = vsel %vm192, %v432, 0
    %439 = vmatprep.subr.bf16.mxu0 0
    %440 = vmatpush1.bf16.msra.mxu0 %v437
    %441 = vmatprep.subr.bf16.mxu0 0
    %442 = vmatpush1.bf16.msra.mxu0 0
    %443 = vmatprep.subr.bf16.mxu0 0
    %444 = vmatpush1.bf16.msra.mxu0 0
    %445 = vmatprep.subr.bf16.mxu0 0
    %446 = vmatpush1.bf16.msra.mxu0 0
    %447 = vmatprep.subr.bf16.mxu0 0
    %448 = vmatpush1.bf16.msra.mxu0 0
    %449 = vmatprep.subr.bf16.mxu0 0
    %450 = vmatpush1.bf16.msra.mxu0 0
    %451 = vmatprep.subr.bf16.mxu0 0
    %452 = vmatpush1.bf16.msra.mxu0 0
    %453 = vmatprep.subr.bf16.mxu0 0
    %454 = vmatpush1.bf16.msra.mxu0 0
    %455 = vmatprep.subr.bf16.mxu0 0
    %456 = vmatpush1.bf16.msra.mxu0 0
    %457 = vmatprep.subr.bf16.mxu0 0
    %458 = vmatpush1.bf16.msra.mxu0 0
    %459 = vmatprep.subr.bf16.mxu0 0
    %460 = vmatpush1.bf16.msra.mxu0 0
    %461 = vmatprep.subr.bf16.mxu0 0
    %462 = vmatpush1.bf16.msra.mxu0 0
    %463 = vmatprep.subr.bf16.mxu0 0
    %464 = vmatpush1.bf16.msra.mxu0 0
    %465 = vmatprep.subr.bf16.mxu0 0
    %466 = vmatpush1.bf16.msra.mxu0 0
    %467 = vmatprep.subr.bf16.mxu0 0
    %468 = vmatpush1.bf16.msra.mxu0 0
    %469 = vmatprep.subr.bf16.mxu0 0
    %470 = vmatpush1.bf16.msra.mxu0 0
    %471 = vmatprep.mubr.bf16.mxu0 0
    %472 = vmatmul.mubr.bf16.gmra.mrb[0].mxu0 %v434
    %v473 = vpop.f32.mrb[0].mxu0
    %v474 = vadd.f32 0.0, %v473
    %v475 = vpop.f32.mrb[0].mxu0
    %v476 = vpop.f32.mrb[0].mxu0
    %v477 = vpop.f32.mrb[0].mxu0
    %478 = vdwg.mxu0
    %480 = vrot.lane.b32.xlu0 %v474, 16
    %v481 = vpop.permute.xlu0 %480
    %vm483 = vcmask 195712
    %484 = vst.msk [vmem:[#allocation2] sm:$0xff] %vm483, %v481
    %485 = vrot.lane.b32.xlu0 %v116, 104
    %v486 = vpop.permute.xlu0 %485
    %487 = vrot.lane.b32.xlu0 %v116, 72
    %v488 = vpop.permute.xlu0 %487
    %v490 = vsel %vm120, %v486, 0
    %v493 = vsel %vm120, %v488, 0
    %495 = vmatprep.subr.bf16.mxu0 0
    %496 = vmatpush1.bf16.xpose.msra.mxu0 %v493
    %497 = vmatprep.subr.bf16.mxu0 0
    %498 = vmatpush1.bf16.xpose.msra.mxu0 0
    %499 = vmatprep.subr.bf16.mxu0 0
    %500 = vmatpush1.bf16.xpose.msra.mxu0 0
    %501 = vmatprep.subr.bf16.mxu0 0
    %502 = vmatpush1.bf16.xpose.msra.mxu0 0
    %503 = vmatprep.subr.bf16.mxu0 0
    %504 = vmatpush1.bf16.xpose.msra.mxu0 0
    %505 = vmatprep.subr.bf16.mxu0 0
    %506 = vmatpush1.bf16.xpose.msra.mxu0 0
    %507 = vmatprep.subr.bf16.mxu0 0
    %508 = vmatpush1.bf16.xpose.msra.mxu0 0
    %509 = vmatprep.subr.bf16.mxu0 0
    %510 = vmatpush1.bf16.xpose.msra.mxu0 0
    %511 = vmatprep.subr.bf16.mxu0 0
    %512 = vmatpush1.bf16.xpose.msra.mxu0 0
    %513 = vmatprep.subr.bf16.mxu0 0
    %514 = vmatpush1.bf16.xpose.msra.mxu0 0
    %515 = vmatprep.subr.bf16.mxu0 0
    %516 = vmatpush1.bf16.xpose.msra.mxu0 0
    %517 = vmatprep.subr.bf16.mxu0 0
    %518 = vmatpush1.bf16.xpose.msra.mxu0 0
    %519 = vmatprep.subr.bf16.mxu0 0
    %520 = vmatpush1.bf16.xpose.msra.mxu0 0
    %521 = vmatprep.subr.bf16.mxu0 0
    %522 = vmatpush1.bf16.xpose.msra.mxu0 0
    %523 = vmatprep.subr.bf16.mxu0 0
    %524 = vmatpush1.bf16.xpose.msra.mxu0 0
    %525 = vmatprep.subr.bf16.mxu0 0
    %526 = vmatpush1.bf16.xpose.msra.mxu0 0
    %527 = vmatprep.mubr.bf16.mxu0 0
    %528 = vmatmul.mubr.bf16.gmra.mrb[0].mxu0 %v490
    %v529 = vpop.f32.mrb[0].mxu0
    %v530 = vadd.f32 0.0, %v529
    %v531 = vpop.f32.mrb[0].mxu0
    %v532 = vpop.f32.mrb[0].mxu0
    %v533 = vpop.f32.mrb[0].mxu0
    %534 = vdwg.mxu0
    %v535 = vsel %vm120, %v530, -inf
    %v536 = vrot.slane %v535, 4
    %v537 = vmax.f32 %v535, %v536
    %v538 = vrot.slane %v537, 2
    %v539 = vmax.f32 %v537, %v538
    %v540 = vrot.slane %v539, 1
    %v541 = vmax.f32 %v539, %v540
    %v542 = vsub.f32 %v530, %v541
    %v543 = vmul.f32 %v542, 1.442695
    %v544 = vpow.pop %v543
    %v545 = vsel %vm120, %v544, 0.0
    %v546 = vrot.slane %v545, 4
    %v547 = vadd.f32 %v545, %v546
    %v548 = vrot.slane %v547, 2
    %v549 = vadd.f32 %v547, %v548
    %v550 = vrot.slane %v549, 1
    %v551 = vadd.f32 %v549, %v550
    %v552 = vrcp.pop %v551
    %v553 = vmul.f32 %v544, %v552
    %v554 = vpack.c.bf16 %v553, %v553
    %555 = vrot.lane.b32.xlu0 %v116, 40
    %v556 = vpop.permute.xlu0 %555
    %v558 = vsel %vm120, %v554, 0
    %v561 = vsel %vm192, %v556, 0
    %563 = vmatprep.subr.bf16.mxu0 0
    %564 = vmatpush1.bf16.msra.mxu0 %v561
    %565 = vmatprep.subr.bf16.mxu0 0
    %566 = vmatpush1.bf16.msra.mxu0 0
    %567 = vmatprep.subr.bf16.mxu0 0
    %568 = vmatpush1.bf16.msra.mxu0 0
    %569 = vmatprep.subr.bf16.mxu0 0
    %570 = vmatpush1.bf16.msra.mxu0 0
    %571 = vmatprep.subr.bf16.mxu0 0
    %572 = vmatpush1.bf16.msra.mxu0 0
    %573 = vmatprep.subr.bf16.mxu0 0
    %574 = vmatpush1.bf16.msra.mxu0 0
    %575 = vmatprep.subr.bf16.mxu0 0
    %576 = vmatpush1.bf16.msra.mxu0 0
    %577 = vmatprep.subr.bf16.mxu0 0
    %578 = vmatpush1.bf16.msra.mxu0 0
    %579 = vmatprep.subr.bf16.mxu0 0
    %580 = vmatpush1.bf16.msra.mxu0 0
    %581 = vmatprep.subr.bf16.mxu0 0
    %582 = vmatpush1.bf16.msra.mxu0 0
    %583 = vmatprep.subr.bf16.mxu0 0
    %584 = vmatpush1.bf16.msra.mxu0 0
    %585 = vmatprep.subr.bf16.mxu0 0
    %586 = vmatpush1.bf16.msra.mxu0 0
    %587 = vmatprep.subr.bf16.mxu0 0
    %588 = vmatpush1.bf16.msra.mxu0 0
    %589 = vmatprep.subr.bf16.mxu0 0
    %590 = vmatpush1.bf16.msra.mxu0 0
    %591 = vmatprep.subr.bf16.mxu0 0
    %592 = vmatpush1.bf16.msra.mxu0 0
    %593 = vmatprep.subr.bf16.mxu0 0
    %594 = vmatpush1.bf16.msra.mxu0 0
    %595 = vmatprep.mubr.bf16.mxu0 0
    %596 = vmatmul.mubr.bf16.gmra.mrb[0].mxu0 %v558
    %v597 = vpop.f32.mrb[0].mxu0
    %v598 = vadd.f32 0.0, %v597
    %v599 = vpop.f32.mrb[0].mxu0
    %v600 = vpop.f32.mrb[0].mxu0
    %v601 = vpop.f32.mrb[0].mxu0
    %602 = vdwg.mxu0
    %604 = vrot.lane.b32.xlu0 %v598, 24
    %v605 = vpop.permute.xlu0 %604
    %vm607 = vcmask 261312
    %608 = vst.msk [vmem:[#allocation2] sm:$0xff] %vm607, %v605
    %v609 = vpack.c.bf16 %v113, %v113
    %611 = vrot.lane.b32.xlu0 %v609, 96
    %v612 = vpop.permute.xlu0 %611
    %v614 = vsel %vm120, %v609, 0
    %v617 = vsel %vm120, %v612, 0
    %619 = vmatprep.subr.bf16.mxu0 0
    %620 = vmatpush1.bf16.xpose.msra.mxu0 %v617
    %621 = vmatprep.subr.bf16.mxu0 0
    %622 = vmatpush1.bf16.xpose.msra.mxu0 0
    %623 = vmatprep.subr.bf16.mxu0 0
    %624 = vmatpush1.bf16.xpose.msra.mxu0 0
    %625 = vmatprep.subr.bf16.mxu0 0
    %626 = vmatpush1.bf16.xpose.msra.mxu0 0
    %627 = vmatprep.subr.bf16.mxu0 0
    %628 = vmatpush1.bf16.xpose.msra.mxu0 0
    %629 = vmatprep.subr.bf16.mxu0 0
    %630 = vmatpush1.bf16.xpose.msra.mxu0 0
    %631 = vmatprep.subr.bf16.mxu0 0
    %632 = vmatpush1.bf16.xpose.msra.mxu0 0
    %633 = vmatprep.subr.bf16.mxu0 0
    %634 = vmatpush1.bf16.xpose.msra.mxu0 0
    %635 = vmatprep.subr.bf16.mxu0 0
    %636 = vmatpush1.bf16.xpose.msra.mxu0 0
    %637 = vmatprep.subr.bf16.mxu0 0
    %638 = vmatpush1.bf16.xpose.msra.mxu0 0
    %639 = vmatprep.subr.bf16.mxu0 0
    %640 = vmatpush1.bf16.xpose.msra.mxu0 0
    %641 = vmatprep.subr.bf16.mxu0 0
    %642 = vmatpush1.bf16.xpose.msra.mxu0 0
    %643 = vmatprep.subr.bf16.mxu0 0
    %644 = vmatpush1.bf16.xpose.msra.mxu0 0
    %645 = vmatprep.subr.bf16.mxu0 0
    %646 = vmatpush1.bf16.xpose.msra.mxu0 0
    %647 = vmatprep.subr.bf16.mxu0 0
    %648 = vmatpush1.bf16.xpose.msra.mxu0 0
    %649 = vmatprep.subr.bf16.mxu0 0
    %650 = vmatpush1.bf16.xpose.msra.mxu0 0
    %651 = vmatprep.mubr.bf16.mxu0 0
    %652 = vmatmul.mubr.bf16.gmra.mrb[0].mxu0 %v614
    %v653 = vpop.f32.mrb[0].mxu0
    %v654 = vadd.f32 0.0, %v653
    %v655 = vpop.f32.mrb[0].mxu0
    %v656 = vpop.f32.mrb[0].mxu0
    %v657 = vpop.f32.mrb[0].mxu0
    %658 = vdwg.mxu0
    %v659 = vsel %vm120, %v654, -inf
    %v660 = vrot.slane %v659, 4
    %v661 = vmax.f32 %v659, %v660
    %v662 = vrot.slane %v661, 2
    %v663 = vmax.f32 %v661, %v662
    %v664 = vrot.slane %v663, 1
    %v665 = vmax.f32 %v663, %v664
    %v666 = vsub.f32 %v654, %v665
    %v667 = vmul.f32 %v666, 1.442695
    %v668 = vpow.pop %v667
    %v669 = vsel %vm120, %v668, 0.0
    %v670 = vrot.slane %v669, 4
    %v671 = vadd.f32 %v669, %v670
    %v672 = vrot.slane %v671, 2
    %v673 = vadd.f32 %v671, %v672
    %v674 = vrot.slane %v673, 1
    %v675 = vadd.f32 %v673, %v674
    %v676 = vrcp.pop %v675
    %v677 = vmul.f32 %v668, %v676
    %v678 = vpack.c.bf16 %v677, %v677
    %679 = vrot.lane.b32.xlu0 %v609, 64
    %v680 = vpop.permute.xlu0 %679
    %v682 = vsel %vm120, %v678, 0
    %v685 = vsel %vm192, %v680, 0
    %687 = vmatprep.subr.bf16.mxu0 0
    %688 = vmatpush1.bf16.msra.mxu0 %v685
    %689 = vmatprep.subr.bf16.mxu0 0
    %690 = vmatpush1.bf16.msra.mxu0 0
    %691 = vmatprep.subr.bf16.mxu0 0
    %692 = vmatpush1.bf16.msra.mxu0 0
    %693 = vmatprep.subr.bf16.mxu0 0
    %694 = vmatpush1.bf16.msra.mxu0 0
    %695 = vmatprep.subr.bf16.mxu0 0
    %696 = vmatpush1.bf16.msra.mxu0 0
    %697 = vmatprep.subr.bf16.mxu0 0
    %698 = vmatpush1.bf16.msra.mxu0 0
    %699 = vmatprep.subr.bf16.mxu0 0
    %700 = vmatpush1.bf16.msra.mxu0 0
    %701 = vmatprep.subr.bf16.mxu0 0
    %702 = vmatpush1.bf16.msra.mxu0 0
    %703 = vmatprep.subr.bf16.mxu0 0
    %704 = vmatpush1.bf16.msra.mxu0 0
    %705 = vmatprep.subr.bf16.mxu0 0
    %706 = vmatpush1.bf16.msra.mxu0 0
    %707 = vmatprep.subr.bf16.mxu0 0
    %708 = vmatpush1.bf16.msra.mxu0 0
    %709 = vmatprep.subr.bf16.mxu0 0
    %710 = vmatpush1.bf16.msra.mxu0 0
    %711 = vmatprep.subr.bf16.mxu0 0
    %712 = vmatpush1.bf16.msra.mxu0 0
    %713 = vmatprep.subr.bf16.mxu0 0
    %714 = vmatpush1.bf16.msra.mxu0 0
    %715 = vmatprep.subr.bf16.mxu0 0
    %716 = vmatpush1.bf16.msra.mxu0 0
    %717 = vmatprep.subr.bf16.mxu0 0
    %718 = vmatpush1.bf16.msra.mxu0 0
    %719 = vmatprep.mubr.bf16.mxu0 0
    %720 = vmatmul.mubr.bf16.gmra.mrb[0].mxu0 %v682
    %v721 = vpop.f32.mrb[0].mxu0
    %v722 = vadd.f32 0.0, %v721
    %v723 = vpop.f32.mrb[0].mxu0
    %v724 = vpop.f32.mrb[0].mxu0
    %v725 = vpop.f32.mrb[0].mxu0
    %726 = vdwg.mxu0
    %727 = vst.msk [vmem:[#allocation2 + $0x8] sm:$0xff] %vm120, %v722
    %728 = vrot.lane.b32.xlu0 %v609, 120
    %v729 = vpop.permute.xlu0 %728
    %730 = vrot.lane.b32.xlu0 %v609, 88
    %v731 = vpop.permute.xlu0 %730
    %v733 = vsel %vm120, %v729, 0
    %v736 = vsel %vm120, %v731, 0
    %738 = vmatprep.subr.bf16.mxu0 0
    %739 = vmatpush1.bf16.xpose.msra.mxu0 %v736
    %740 = vmatprep.subr.bf16.mxu0 0
    %741 = vmatpush1.bf16.xpose.msra.mxu0 0
    %742 = vmatprep.subr.bf16.mxu0 0
    %743 = vmatpush1.bf16.xpose.msra.mxu0 0
    %744 = vmatprep.subr.bf16.mxu0 0
    %745 = vmatpush1.bf16.xpose.msra.mxu0 0
    %746 = vmatprep.subr.bf16.mxu0 0
    %747 = vmatpush1.bf16.xpose.msra.mxu0 0
    %748 = vmatprep.subr.bf16.mxu0 0
    %749 = vmatpush1.bf16.xpose.msra.mxu0 0
    %750 = vmatprep.subr.bf16.mxu0 0
    %751 = vmatpush1.bf16.xpose.msra.mxu0 0
    %752 = vmatprep.subr.bf16.mxu0 0
    %753 = vmatpush1.bf16.xpose.msra.mxu0 0
    %754 = vmatprep.subr.bf16.mxu0 0
    %755 = vmatpush1.bf16.xpose.msra.mxu0 0
    %756 = vmatprep.subr.bf16.mxu0 0
    %757 = vmatpush1.bf16.xpose.msra.mxu0 0
    %758 = vmatprep.subr.bf16.mxu0 0
    %759 = vmatpush1.bf16.xpose.msra.mxu0 0
    %760 = vmatprep.subr.bf16.mxu0 0
    %761 = vmatpush1.bf16.xpose.msra.mxu0 0
    %762 = vmatprep.subr.bf16.mxu0 0
    %763 = vmatpush1.bf16.xpose.msra.mxu0 0
    %764 = vmatprep.subr.bf16.mxu0 0
    %765 = vmatpush1.bf16.xpose.msra.mxu0 0
    %766 = vmatprep.subr.bf16.mxu0 0
    %767 = vmatpush1.bf16.xpose.msra.mxu0 0
    %768 = vmatprep.subr.bf16.mxu0 0
    %769 = vmatpush1.bf16.xpose.msra.mxu0 0
    %770 = vmatprep.mubr.bf16.mxu0 0
    %771 = vmatmul.mubr.bf16.gmra.mrb[0].mxu0 %v733
    %v772 = vpop.f32.mrb[0].mxu0
    %v773 = vadd.f32 0.0, %v772
    %v774 = vpop.f32.mrb[0].mxu0
    %v775 = vpop.f32.mrb[0].mxu0
    %v776 = vpop.f32.mrb[0].mxu0
    %777 = vdwg.mxu0
    %v778 = vsel %vm120, %v773, -inf
    %v779 = vrot.slane %v778, 4
    %v780 = vmax.f32 %v778, %v779
    %v781 = vrot.slane %v780, 2
    %v782 = vmax.f32 %v780, %v781
    %v783 = vrot.slane %v782, 1
    %v784 = vmax.f32 %v782, %v783
    %v785 = vsub.f32 %v773, %v784
    %v786 = vmul.f32 %v785, 1.442695
    %v787 = vpow.pop %v786
    %v788 = vsel %vm120, %v787, 0.0
    %v789 = vrot.slane %v788, 4
    %v790 = vadd.f32 %v788, %v789
    %v791 = vrot.slane %v790, 2
    %v792 = vadd.f32 %v790, %v791
    %v793 = vrot.slane %v792, 1
    %v794 = vadd.f32 %v792, %v793
    %v795 = vrcp.pop %v794
    %v796 = vmul.f32 %v787, %v795
    %v797 = vpack.c.bf16 %v796, %v796
    %798 = vrot.lane.b32.xlu0 %v609, 56
    %v799 = vpop.permute.xlu0 %798
    %v801 = vsel %vm120, %v797, 0
    %v804 = vsel %vm192, %v799, 0
    %806 = vmatprep.subr.bf16.mxu0 0
    %807 = vmatpush1.bf16.msra.mxu0 %v804
    %808 = vmatprep.subr.bf16.mxu0 0
    %809 = vmatpush1.bf16.msra.mxu0 0
    %810 = vmatprep.subr.bf16.mxu0 0
    %811 = vmatpush1.bf16.msra.mxu0 0
    %812 = vmatprep.subr.bf16.mxu0 0
    %813 = vmatpush1.bf16.msra.mxu0 0
    %814 = vmatprep.subr.bf16.mxu0 0
    %815 = vmatpush1.bf16.msra.mxu0 0
    %816 = vmatprep.subr.bf16.mxu0 0
    %817 = vmatpush1.bf16.msra.mxu0 0
    %818 = vmatprep.subr.bf16.mxu0 0
    %819 = vmatpush1.bf16.msra.mxu0 0
    %820 = vmatprep.subr.bf16.mxu0 0
    %821 = vmatpush1.bf16.msra.mxu0 0
    %822 = vmatprep.subr.bf16.mxu0 0
    %823 = vmatpush1.bf16.msra.mxu0 0
    %824 = vmatprep.subr.bf16.mxu0 0
    %825 = vmatpush1.bf16.msra.mxu0 0
    %826 = vmatprep.subr.bf16.mxu0 0
    %827 = vmatpush1.bf16.msra.mxu0 0
    %828 = vmatprep.subr.bf16.mxu0 0
    %829 = vmatpush1.bf16.msra.mxu0 0
    %830 = vmatprep.subr.bf16.mxu0 0
    %831 = vmatpush1.bf16.msra.mxu0 0
    %832 = vmatprep.subr.bf16.mxu0 0
    %833 = vmatpush1.bf16.msra.mxu0 0
    %834 = vmatprep.subr.bf16.mxu0 0
    %835 = vmatpush1.bf16.msra.mxu0 0
    %836 = vmatprep.subr.bf16.mxu0 0
    %837 = vmatpush1.bf16.msra.mxu0 0
    %838 = vmatprep.mubr.bf16.mxu0 0
    %839 = vmatmul.mubr.bf16.gmra.mrb[0].mxu0 %v801
    %v840 = vpop.f32.mrb[0].mxu0
    %v841 = vadd.f32 0.0, %v840
    %v842 = vpop.f32.mrb[0].mxu0
    %v843 = vpop.f32.mrb[0].mxu0
    %v844 = vpop.f32.mrb[0].mxu0
    %845 = vdwg.mxu0
    %847 = vrot.lane.b32.xlu0 %v841, 8
    %v848 = vpop.permute.xlu0 %847
    %850 = vst.msk [vmem:[#allocation2 + $0x8] sm:$0xff] %vm359, %v848
    %851 = vrot.lane.b32.xlu0 %v609, 112
    %v852 = vpop.permute.xlu0 %851
    %853 = vrot.lane.b32.xlu0 %v609, 80
    %v854 = vpop.permute.xlu0 %853
    %v856 = vsel %vm120, %v852, 0
    %v859 = vsel %vm120, %v854, 0
    %861 = vmatprep.subr.bf16.mxu0 0
    %862 = vmatpush1.bf16.xpose.msra.mxu0 %v859
    %863 = vmatprep.subr.bf16.mxu0 0
    %864 = vmatpush1.bf16.xpose.msra.mxu0 0
    %865 = vmatprep.subr.bf16.mxu0 0
    %866 = vmatpush1.bf16.xpose.msra.mxu0 0
    %867 = vmatprep.subr.bf16.mxu0 0
    %868 = vmatpush1.bf16.xpose.msra.mxu0 0
    %869 = vmatprep.subr.bf16.mxu0 0
    %870 = vmatpush1.bf16.xpose.msra.mxu0 0
    %871 = vmatprep.subr.bf16.mxu0 0
    %872 = vmatpush1.bf16.xpose.msra.mxu0 0
    %873 = vmatprep.subr.bf16.mxu0 0
    %874 = vmatpush1.bf16.xpose.msra.mxu0 0
    %875 = vmatprep.subr.bf16.mxu0 0
    %876 = vmatpush1.bf16.xpose.msra.mxu0 0
    %877 = vmatprep.subr.bf16.mxu0 0
    %878 = vmatpush1.bf16.xpose.msra.mxu0 0
    %879 = vmatprep.subr.bf16.mxu0 0
    %880 = vmatpush1.bf16.xpose.msra.mxu0 0
    %881 = vmatprep.subr.bf16.mxu0 0
    %882 = vmatpush1.bf16.xpose.msra.mxu0 0
    %883 = vmatprep.subr.bf16.mxu0 0
    %884 = vmatpush1.bf16.xpose.msra.mxu0 0
    %885 = vmatprep.subr.bf16.mxu0 0
    %886 = vmatpush1.bf16.xpose.msra.mxu0 0
    %887 = vmatprep.subr.bf16.mxu0 0
    %888 = vmatpush1.bf16.xpose.msra.mxu0 0
    %889 = vmatprep.subr.bf16.mxu0 0
    %890 = vmatpush1.bf16.xpose.msra.mxu0 0
    %891 = vmatprep.subr.bf16.mxu0 0
    %892 = vmatpush1.bf16.xpose.msra.mxu0 0
    %893 = vmatprep.mubr.bf16.mxu0 0
    %894 = vmatmul.mubr.bf16.gmra.mrb[0].mxu0 %v856
    %v895 = vpop.f32.mrb[0].mxu0
    %v896 = vadd.f32 0.0, %v895
    %v897 = vpop.f32.mrb[0].mxu0
    %v898 = vpop.f32.mrb[0].mxu0
    %v899 = vpop.f32.mrb[0].mxu0
    %900 = vdwg.mxu0
    %v901 = vsel %vm120, %v896, -inf
    %v902 = vrot.slane %v901, 4
    %v903 = vmax.f32 %v901, %v902
    %v904 = vrot.slane %v903, 2
    %v905 = vmax.f32 %v903, %v904
    %v906 = vrot.slane %v905, 1
    %v907 = vmax.f32 %v905, %v906
    %v908 = vsub.f32 %v896, %v907
    %v909 = vmul.f32 %v908, 1.442695
    %v910 = vpow.pop %v909
    %v911 = vsel %vm120, %v910, 0.0
    %v912 = vrot.slane %v911, 4
    %v913 = vadd.f32 %v911, %v912
    %v914 = vrot.slane %v913, 2
    %v915 = vadd.f32 %v913, %v914
    %v916 = vrot.slane %v915, 1
    %v917 = vadd.f32 %v915, %v916
    %v918 = vrcp.pop %v917
    %v919 = vmul.f32 %v910, %v918
    %v920 = vpack.c.bf16 %v919, %v919
    %921 = vrot.lane.b32.xlu0 %v609, 48
    %v922 = vpop.permute.xlu0 %921
    %v924 = vsel %vm120, %v920, 0
    %v927 = vsel %vm192, %v922, 0
    %929 = vmatprep.subr.bf16.mxu0 0
    %930 = vmatpush1.bf16.msra.mxu0 %v927
    %931 = vmatprep.subr.bf16.mxu0 0
    %932 = vmatpush1.bf16.msra.mxu0 0
    %933 = vmatprep.subr.bf16.mxu0 0
    %934 = vmatpush1.bf16.msra.mxu0 0
    %935 = vmatprep.subr.bf16.mxu0 0
    %936 = vmatpush1.bf16.msra.mxu0 0
    %937 = vmatprep.subr.bf16.mxu0 0
    %938 = vmatpush1.bf16.msra.mxu0 0
    %939 = vmatprep.subr.bf16.mxu0 0
    %940 = vmatpush1.bf16.msra.mxu0 0
    %941 = vmatprep.subr.bf16.mxu0 0
    %942 = vmatpush1.bf16.msra.mxu0 0
    %943 = vmatprep.subr.bf16.mxu0 0
    %944 = vmatpush1.bf16.msra.mxu0 0
    %945 = vmatprep.subr.bf16.mxu0 0
    %946 = vmatpush1.bf16.msra.mxu0 0
    %947 = vmatprep.subr.bf16.mxu0 0
    %948 = vmatpush1.bf16.msra.mxu0 0
    %949 = vmatprep.subr.bf16.mxu0 0
    %950 = vmatpush1.bf16.msra.mxu0 0
    %951 = vmatprep.subr.bf16.mxu0 0
    %952 = vmatpush1.bf16.msra.mxu0 0
    %953 = vmatprep.subr.bf16.mxu0 0
    %954 = vmatpush1.bf16.msra.mxu0 0
    %955 = vmatprep.subr.bf16.mxu0 0
    %956 = vmatpush1.bf16.msra.mxu0 0
    %957 = vmatprep.subr.bf16.mxu0 0
    %958 = vmatpush1.bf16.msra.mxu0 0
    %959 = vmatprep.subr.bf16.mxu0 0
    %960 = vmatpush1.bf16.msra.mxu0 0
    %961 = vmatprep.mubr.bf16.mxu0 0
    %962 = vmatmul.mubr.bf16.gmra.mrb[0].mxu0 %v924
    %v963 = vpop.f32.mrb[0].mxu0
    %v964 = vadd.f32 0.0, %v963
    %v965 = vpop.f32.mrb[0].mxu0
    %v966 = vpop.f32.mrb[0].mxu0
    %v967 = vpop.f32.mrb[0].mxu0
    %968 = vdwg.mxu0
    %970 = vrot.lane.b32.xlu0 %v964, 16
    %v971 = vpop.permute.xlu0 %970
    %973 = vst.msk [vmem:[#allocation2 + $0x8] sm:$0xff] %vm483, %v971
    %974 = vrot.lane.b32.xlu0 %v609, 104
    %v975 = vpop.permute.xlu0 %974
    %976 = vrot.lane.b32.xlu0 %v609, 72
    %v977 = vpop.permute.xlu0 %976
    %v979 = vsel %vm120, %v975, 0
    %v982 = vsel %vm120, %v977, 0
    %984 = vmatprep.subr.bf16.mxu0 0
    %985 = vmatpush1.bf16.xpose.msra.mxu0 %v982
    %986 = vmatprep.subr.bf16.mxu0 0
    %987 = vmatpush1.bf16.xpose.msra.mxu0 0
    %988 = vmatprep.subr.bf16.mxu0 0
    %989 = vmatpush1.bf16.xpose.msra.mxu0 0
    %990 = vmatprep.subr.bf16.mxu0 0
    %991 = vmatpush1.bf16.xpose.msra.mxu0 0
    %992 = vmatprep.subr.bf16.mxu0 0
    %993 = vmatpush1.bf16.xpose.msra.mxu0 0
    %994 = vmatprep.subr.bf16.mxu0 0
    %995 = vmatpush1.bf16.xpose.msra.mxu0 0
    %996 = vmatprep.subr.bf16.mxu0 0
    %997 = vmatpush1.bf16.xpose.msra.mxu0 0
    %998 = vmatprep.subr.bf16.mxu0 0
    %999 = vmatpush1.bf16.xpose.msra.mxu0 0
    %1000 = vmatprep.subr.bf16.mxu0 0
    %1001 = vmatpush1.bf16.xpose.msra.mxu0 0
    %1002 = vmatprep.subr.bf16.mxu0 0
    %1003 = vmatpush1.bf16.xpose.msra.mxu0 0
    %1004 = vmatprep.subr.bf16.mxu0 0
    %1005 = vmatpush1.bf16.xpose.msra.mxu0 0
    %1006 = vmatprep.subr.bf16.mxu0 0
    %1007 = vmatpush1.bf16.xpose.msra.mxu0 0
    %1008 = vmatprep.subr.bf16.mxu0 0
    %1009 = vmatpush1.bf16.xpose.msra.mxu0 0
    %1010 = vmatprep.subr.bf16.mxu0 0
    %1011 = vmatpush1.bf16.xpose.msra.mxu0 0
    %1012 = vmatprep.subr.bf16.mxu0 0
    %1013 = vmatpush1.bf16.xpose.msra.mxu0 0
    %1014 = vmatprep.subr.bf16.mxu0 0
    %1015 = vmatpush1.bf16.xpose.msra.mxu0 0
    %1016 = vmatprep.mubr.bf16.mxu0 0
    %1017 = vmatmul.mubr.bf16.gmra.mrb[0].mxu0 %v979
    %v1018 = vpop.f32.mrb[0].mxu0
    %v1019 = vadd.f32 0.0, %v1018
    %v1020 = vpop.f32.mrb[0].mxu0
    %v1021 = vpop.f32.mrb[0].mxu0
    %v1022 = vpop.f32.mrb[0].mxu0
    %1023 = vdwg.mxu0
    %v1024 = vsel %vm120, %v1019, -inf
    %v1025 = vrot.slane %v1024, 4
    %v1026 = vmax.f32 %v1024, %v1025
    %v1027 = vrot.slane %v1026, 2
    %v1028 = vmax.f32 %v1026, %v1027
    %v1029 = vrot.slane %v1028, 1
    %v1030 = vmax.f32 %v1028, %v1029
    %v1031 = vsub.f32 %v1019, %v1030
    %v1032 = vmul.f32 %v1031, 1.442695
    %v1033 = vpow.pop %v1032
    %v1034 = vsel %vm120, %v1033, 0.0
    %v1035 = vrot.slane %v1034, 4
    %v1036 = vadd.f32 %v1034, %v1035
    %v1037 = vrot.slane %v1036, 2
    %v1038 = vadd.f32 %v1036, %v1037
    %v1039 = vrot.slane %v1038, 1
    %v1040 = vadd.f32 %v1038, %v1039
    %v1041 = vrcp.pop %v1040
    %v1042 = vmul.f32 %v1033, %v1041
    %v1043 = vpack.c.bf16 %v1042, %v1042
    %1044 = vrot.lane.b32.xlu0 %v609, 40
    %v1045 = vpop.permute.xlu0 %1044
    %v1047 = vsel %vm120, %v1043, 0
    %v1050 = vsel %vm192, %v1045, 0
    %1052 = vmatprep.subr.bf16.mxu0 0
    %1053 = vmatpush1.bf16.msra.mxu0 %v1050
    %1054 = vmatprep.subr.bf16.mxu0 0
    %1055 = vmatpush1.bf16.msra.mxu0 0
    %1056 = vmatprep.subr.bf16.mxu0 0
    %1057 = vmatpush1.bf16.msra.mxu0 0
    %1058 = vmatprep.subr.bf16.mxu0 0
    %1059 = vmatpush1.bf16.msra.mxu0 0
    %1060 = vmatprep.subr.bf16.mxu0 0
    %1061 = vmatpush1.bf16.msra.mxu0 0
    %1062 = vmatprep.subr.bf16.mxu0 0
    %1063 = vmatpush1.bf16.msra.mxu0 0
    %1064 = vmatprep.subr.bf16.mxu0 0
    %1065 = vmatpush1.bf16.msra.mxu0 0
    %1066 = vmatprep.subr.bf16.mxu0 0
    %1067 = vmatpush1.bf16.msra.mxu0 0
    %1068 = vmatprep.subr.bf16.mxu0 0
    %1069 = vmatpush1.bf16.msra.mxu0 0
    %1070 = vmatprep.subr.bf16.mxu0 0
    %1071 = vmatpush1.bf16.msra.mxu0 0
    %1072 = vmatprep.subr.bf16.mxu0 0
    %1073 = vmatpush1.bf16.msra.mxu0 0
    %1074 = vmatprep.subr.bf16.mxu0 0
    %1075 = vmatpush1.bf16.msra.mxu0 0
    %1076 = vmatprep.subr.bf16.mxu0 0
    %1077 = vmatpush1.bf16.msra.mxu0 0
    %1078 = vmatprep.subr.bf16.mxu0 0
    %1079 = vmatpush1.bf16.msra.mxu0 0
    %1080 = vmatprep.subr.bf16.mxu0 0
    %1081 = vmatpush1.bf16.msra.mxu0 0
    %1082 = vmatprep.subr.bf16.mxu0 0
    %1083 = vmatpush1.bf16.msra.mxu0 0
    %1084 = vmatprep.mubr.bf16.mxu0 0
    %1085 = vmatmul.mubr.bf16.gmra.mrb[0].mxu0 %v1047
    %v1086 = vpop.f32.mrb[0].mxu0
    %v1087 = vadd.f32 0.0, %v1086
    %v1088 = vpop.f32.mrb[0].mxu0
    %v1089 = vpop.f32.mrb[0].mxu0
    %v1090 = vpop.f32.mrb[0].mxu0
    %1091 = vdwg.mxu0
    %1093 = vrot.lane.b32.xlu0 %v1087, 24
    %v1094 = vpop.permute.xlu0 %1093
    %1096 = vst.msk [vmem:[#allocation2 + $0x8] sm:$0xff] %vm607, %v1094
    %v1097 = vld [vmem:[#allocation2] sm:$0xff]
    %v1098 = vld [vmem:[#allocation2 + $0x8] sm:$0xff]
    %v1099 = vpack.c.bf16 %v1098, %v1097
    %v1100 = vld [vmem:[%s3] sm:$0xf]
    %v1101 = vld [vmem:[%s3 + $0x4] sm:$0xf]
    %v1102 = vld [vmem:[%s3 + $0x8] sm:$0xf]
    %v1103 = vld [vmem:[%s3 + $0xc] sm:$0xf]
    %v1104 = vld [vmem:[%s7] sm:$0x1]
    %v1105 = vlaneseq
    %v1106 = vshrl.u32 %v1105, 7
    %v1107 = vsub.s32 0, %v1106
    %v1108 = vrot.slane %v1104, %v1107
    %v1113 = vunpack.c.l.b16 %v1100
    %v1114 = vunpack.c.l.b16 %v1101
    %v1115 = vunpack.c.l.b16 %v1102
    %v1116 = vunpack.c.l.b16 %v1103
    %v1117 = vpack.c.b16 %v1114, %v1113
    %v1118 = vpack.c.b16 %v1116, %v1115
    %v1122 = vsel %vm71, %v1099, 0
    %1124 = vmatprep.subr.bf16.mxu0 0
    %1125 = vmatpush1.bf16.msra.mxu0 %v1117
    %1126 = vmatprep.subr.bf16.mxu0 0
    %1127 = vmatpush1.bf16.msra.mxu0 %v1118
    %1128 = vmatprep.subr.bf16.mxu0 0
    %1129 = vmatpush1.bf16.msra.mxu0 0
    %1130 = vmatprep.subr.bf16.mxu0 0
    %1131 = vmatpush1.bf16.msra.mxu0 0
    %1132 = vmatprep.subr.bf16.mxu0 0
    %1133 = vmatpush1.bf16.msra.mxu0 0
    %1134 = vmatprep.subr.bf16.mxu0 0
    %1135 = vmatpush1.bf16.msra.mxu0 0
    %1136 = vmatprep.subr.bf16.mxu0 0
    %1137 = vmatpush1.bf16.msra.mxu0 0
    %1138 = vmatprep.subr.bf16.mxu0 0
    %1139 = vmatpush1.bf16.msra.mxu0 0
    %1140 = vmatprep.subr.bf16.mxu0 0
    %1141 = vmatpush1.bf16.msra.mxu0 0
    %1142 = vmatprep.subr.bf16.mxu0 0
    %1143 = vmatpush1.bf16.msra.mxu0 0
    %1144 = vmatprep.subr.bf16.mxu0 0
    %1145 = vmatpush1.bf16.msra.mxu0 0
    %1146 = vmatprep.subr.bf16.mxu0 0
    %1147 = vmatpush1.bf16.msra.mxu0 0
    %1148 = vmatprep.subr.bf16.mxu0 0
    %1149 = vmatpush1.bf16.msra.mxu0 0
    %1150 = vmatprep.subr.bf16.mxu0 0
    %1151 = vmatpush1.bf16.msra.mxu0 0
    %1152 = vmatprep.subr.bf16.mxu0 0
    %1153 = vmatpush1.bf16.msra.mxu0 0
    %1154 = vmatprep.subr.bf16.mxu0 0
    %1155 = vmatpush1.bf16.msra.mxu0 0
    %1156 = vmatprep.mubr.bf16.mxu0 0
    %1157 = vmatmul.mubr.bf16.gmra.mrb[0].mxu0 %v1122
    %v1158 = vpop.f32.mrb[0].mxu0
    %v1159 = vadd.f32 %v1108, %v1158
    %v1160 = vpop.f32.mrb[0].mxu0
    %v1161 = vpop.f32.mrb[0].mxu0
    %v1162 = vadd.f32 %v1108, %v1161
    %v1163 = vpop.f32.mrb[0].mxu0
    %1164 = vdwg.mxu0
    %v1165 = vld [vmem:[%s7 + $0x1] sm:$0x1]
    %v1166 = vld [vmem:[%s7 + $0x2] sm:$0x1]
    %v1167 = vsel %vm71, %v1159, 0.0
    %1168 = vadd.xlane.f32.xlu0 %v1167
    %v1169 = vpop.xlane.xlu0 %1168
    %v1170 = vsel %vm71, %v1162, 0.0
    %1171 = vadd.xlane.f32.xlu0 %v1170
    %v1172 = vpop.xlane.xlu0 %1171
    %v1173 = vrcp.pop 32.0
    %v1174 = vmul.f32 %v1169, %v1173
    %v1175 = vmul.f32 %v1172, %v1173
    %v1176 = vsub.f32 %v1159, %v1174
    %v1177 = vsub.f32 %v1162, %v1175
    %v1178 = vmul.f32 %v1176, %v1176
    %v1179 = vmul.f32 %v1177, %v1177
    %v1180 = vsel %vm71, %v1178, 0.0
    %1181 = vadd.xlane.f32.xlu0 %v1180
    %v1182 = vpop.xlane.xlu0 %1181
    %v1183 = vsel %vm71, %v1179, 0.0
    %1184 = vadd.xlane.f32.xlu0 %v1183
    %v1185 = vpop.xlane.xlu0 %1184
    %v1186 = vmul.f32 %v1182, %v1173
    %v1187 = vmul.f32 %v1185, %v1173
    %v1188 = vadd.f32 %v1186, 1e-05
    %v1189 = vadd.f32 %v1187, 1e-05
    %v1190 = vrsqrt.pop %v1188
    %v1191 = vrsqrt.pop %v1189
    %v1192 = vmul.f32 %v1176, %v1190
    %v1193 = vmul.f32 %v1177, %v1191
    %v1194 = vlaneseq
    %v1195 = vshrl.u32 %v1194, 7
    %v1196 = vsub.s32 0, %v1195
    %v1197 = vrot.slane %v1165, %v1196
    %v1198 = vmul.f32 %v1192, %v1197
    %v1199 = vmul.f32 %v1193, %v1197
    %v1200 = vlaneseq
    %v1201 = vshrl.u32 %v1200, 7
    %v1202 = vsub.s32 0, %v1201
    %v1203 = vrot.slane %v1166, %v1202
    %v1204 = vadd.f32 %v1198, %v1203
    %v1205 = vadd.f32 %v1199, %v1203
    %v1206 = vpack.c.bf16 %v1205, %v1204
    %v1207 = vld [vmem:[#allocation3] sm:$0xf]
    %v1208 = vld [vmem:[#allocation3 + $0x4] sm:$0xf]
    %v1209 = vld [vmem:[#allocation3 + $0x8] sm:$0xf]
    %v1210 = vld [vmem:[#allocation3 + $0xc] sm:$0xf]
    %v1211 = vld [vmem:[%s5] sm:$0x1]
    %v1213 = vlaneseq
    %v1214 = vshrl.u32 %v1213, 7
    %v1215 = vsub.s32 0, %v1214
    %v1216 = vrot.slane %v1211, %v1215
    %v1222 = vunpack.c.l.b16 %v1207
    %v1223 = vunpack.c.l.b16 %v1208
    %v1224 = vunpack.c.l.b16 %v1209
    %v1225 = vunpack.c.l.b16 %v1210
    %v1226 = vpack.c.b16 %v1223, %v1222
    %v1227 = vpack.c.b16 %v1225, %v1224
    %v1231 = vsel %vm71, %v1206, 0
    %1233 = vmatprep.subr.bf16.mxu0 0
    %1234 = vmatpush1.bf16.msra.mxu0 %v1226
    %1235 = vmatprep.subr.bf16.mxu0 0
    %1236 = vmatpush1.bf16.msra.mxu0 %v1227
    %1237 = vmatprep.subr.bf16.mxu0 0
    %1238 = vmatpush1.bf16.msra.mxu0 0
    %1239 = vmatprep.subr.bf16.mxu0 0
    %1240 = vmatpush1.bf16.msra.mxu0 0
    %1241 = vmatprep.subr.bf16.mxu0 0
    %1242 = vmatpush1.bf16.msra.mxu0 0
    %1243 = vmatprep.subr.bf16.mxu0 0
    %1244 = vmatpush1.bf16.msra.mxu0 0
    %1245 = vmatprep.subr.bf16.mxu0 0
    %1246 = vmatpush1.bf16.msra.mxu0 0
    %1247 = vmatprep.subr.bf16.mxu0 0
    %1248 = vmatpush1.bf16.msra.mxu0 0
    %1249 = vmatprep.subr.bf16.mxu0 0
    %1250 = vmatpush1.bf16.msra.mxu0 0
    %1251 = vmatprep.subr.bf16.mxu0 0
    %1252 = vmatpush1.bf16.msra.mxu0 0
    %1253 = vmatprep.subr.bf16.mxu0 0
    %1254 = vmatpush1.bf16.msra.mxu0 0
    %1255 = vmatprep.subr.bf16.mxu0 0
    %1256 = vmatpush1.bf16.msra.mxu0 0
    %1257 = vmatprep.subr.bf16.mxu0 0
    %1258 = vmatpush1.bf16.msra.mxu0 0
    %1259 = vmatprep.subr.bf16.mxu0 0
    %1260 = vmatpush1.bf16.msra.mxu0 0
    %1261 = vmatprep.subr.bf16.mxu0 0
    %1262 = vmatpush1.bf16.msra.mxu0 0
    %1263 = vmatprep.subr.bf16.mxu0 0
    %1264 = vmatpush1.bf16.msra.mxu0 0
    %1265 = vmatprep.mubr.bf16.mxu0 0
    %1266 = vmatmul.mubr.bf16.gmra.mrb[0].mxu0 %v1231
    %v1267 = vpop.f32.mrb[0].mxu0
    %v1268 = vadd.f32 %v1216, %v1267
    %v1269 = vpop.f32.mrb[0].mxu0
    %v1270 = vpop.f32.mrb[0].mxu0
    %v1271 = vadd.f32 %v1216, %v1270
    %v1272 = vpop.f32.mrb[0].mxu0
    %1273 = vdwg.mxu0
    %v1274 = vmax.f32 %v1268, 0.0
    %v1275 = vmax.f32 %v1271, 0.0
    %v1276 = vpack.c.bf16 %v1275, %v1274
    %v1277 = vld [vmem:[%s6] sm:$0xf]
    %v1278 = vld [vmem:[%s6 + $0x4] sm:$0xf]
    %v1279 = vld [vmem:[%s6 + $0x8] sm:$0xf]
    %v1280 = vld [vmem:[%s6 + $0xc] sm:$0xf]
    %v1281 = vld [vmem:[%s6 + $0x10] sm:$0xf]
    %v1282 = vld [vmem:[%s6 + $0x14] sm:$0xf]
    %v1283 = vld [vmem:[%s6 + $0x18] sm:$0xf]
    %v1284 = vld [vmem:[%s6 + $0x1c] sm:$0xf]
    %v1285 = vld [vmem:[%s7 + $0x3] sm:$0x1]
    %v1286 = vlaneseq
    %v1287 = vshrl.u32 %v1286, 7
    %v1288 = vsub.s32 0, %v1287
    %v1289 = vrot.slane %v1285, %v1288
    %v1298 = vunpack.c.l.b16 %v1277
    %v1299 = vunpack.c.l.b16 %v1278
    %v1300 = vunpack.c.l.b16 %v1279
    %v1301 = vunpack.c.l.b16 %v1280
    %v1302 = vunpack.c.l.b16 %v1281
    %v1303 = vunpack.c.l.b16 %v1282
    %v1304 = vunpack.c.l.b16 %v1283
    %v1305 = vunpack.c.l.b16 %v1284
    %v1306 = vpack.c.b16 %v1299, %v1298
    %v1307 = vpack.c.b16 %v1301, %v1300
    %v1308 = vpack.c.b16 %v1303, %v1302
    %v1309 = vpack.c.b16 %v1305, %v1304
    %vm1314 = vcmask 523264
    %v1316 = vsel %vm1314, %v1276, 0
    %1318 = vmatprep.subr.bf16.mxu0 0
    %1319 = vmatpush1.bf16.msra.mxu0 %v1306
    %1320 = vmatprep.subr.bf16.mxu0 0
    %1321 = vmatpush1.bf16.msra.mxu0 %v1307
    %1322 = vmatprep.subr.bf16.mxu0 0
    %1323 = vmatpush1.bf16.msra.mxu0 %v1308
    %1324 = vmatprep.subr.bf16.mxu0 0
    %1325 = vmatpush1.bf16.msra.mxu0 %v1309
    %1326 = vmatprep.subr.bf16.mxu0 0
    %1327 = vmatpush1.bf16.msra.mxu0 0
    %1328 = vmatprep.subr.bf16.mxu0 0
    %1329 = vmatpush1.bf16.msra.mxu0 0
    %1330 = vmatprep.subr.bf16.mxu0 0
    %1331 = vmatpush1.bf16.msra.mxu0 0
    %1332 = vmatprep.subr.bf16.mxu0 0
    %1333 = vmatpush1.bf16.msra.mxu0 0
    %1334 = vmatprep.subr.bf16.mxu0 0
    %1335 = vmatpush1.bf16.msra.mxu0 0
    %1336 = vmatprep.subr.bf16.mxu0 0
    %1337 = vmatpush1.bf16.msra.mxu0 0
    %1338 = vmatprep.subr.bf16.mxu0 0
    %1339 = vmatpush1.bf16.msra.mxu0 0
    %1340 = vmatprep.subr.bf16.mxu0 0
    %1341 = vmatpush1.bf16.msra.mxu0 0
    %1342 = vmatprep.subr.bf16.mxu0 0
    %1343 = vmatpush1.bf16.msra.mxu0 0
    %1344 = vmatprep.subr.bf16.mxu0 0
    %1345 = vmatpush1.bf16.msra.mxu0 0
    %1346 = vmatprep.subr.bf16.mxu0 0
    %1347 = vmatpush1.bf16.msra.mxu0 0
    %1348 = vmatprep.subr.bf16.mxu0 0
    %1349 = vmatpush1.bf16.msra.mxu0 0
    %1350 = vmatprep.mubr.bf16.mxu0 0
    %1351 = vmatmul.mubr.bf16.gmra.mrb[0].mxu0 %v1316
    %v1352 = vpop.f32.mrb[0].mxu0
    %v1353 = vadd.f32 %v1289, %v1352
    %v1354 = vpop.f32.mrb[0].mxu0
    %v1355 = vpop.f32.mrb[0].mxu0
    %v1356 = vadd.f32 %v1289, %v1355
    %v1357 = vpop.f32.mrb[0].mxu0
    %1358 = vdwg.mxu0
    %v1359 = vadd.f32 %v1204, %v1353
    %v1360 = vadd.f32 %v1205, %v1356
    %v1361 = vld [vmem:[%s7 + $0x4] sm:$0x1]
    %v1362 = vld [vmem:[%s7 + $0x5] sm:$0x1]
    %v1363 = vsel %vm71, %v1359, 0.0
    %1364 = vadd.xlane.f32.xlu0 %v1363
    %v1365 = vpop.xlane.xlu0 %1364
    %v1366 = vsel %vm71, %v1360, 0.0
    %1367 = vadd.xlane.f32.xlu0 %v1366
    %v1368 = vpop.xlane.xlu0 %1367
    %v1369 = vmul.f32 %v1365, %v1173
    %v1370 = vmul.f32 %v1368, %v1173
    %v1371 = vsub.f32 %v1359, %v1369
    %v1372 = vsub.f32 %v1360, %v1370
    %v1373 = vmul.f32 %v1371, %v1371
    %v1374 = vmul.f32 %v1372, %v1372
    %v1375 = vsel %vm71, %v1373, 0.0
    %1376 = vadd.xlane.f32.xlu0 %v1375
    %v1377 = vpop.xlane.xlu0 %1376
    %v1378 = vsel %vm71, %v1374, 0.0
    %1379 = vadd.xlane.f32.xlu0 %v1378
    %v1380 = vpop.xlane.xlu0 %1379
    %v1381 = vmul.f32 %v1377, %v1173
    %v1382 = vmul.f32 %v1380, %v1173
    %v1383 = vadd.f32 %v1381, 1e-05
    %v1384 = vadd.f32 %v1382, 1e-05
    %v1385 = vrsqrt.pop %v1383
    %v1386 = vrsqrt.pop %v1384
    %v1387 = vmul.f32 %v1371, %v1385
    %v1388 = vmul.f32 %v1372, %v1386
    %v1389 = vlaneseq
    %v1390 = vshrl.u32 %v1389, 7
    %v1391 = vsub.s32 0, %v1390
    %v1392 = vrot.slane %v1361, %v1391
    %v1393 = vmul.f32 %v1387, %v1392
    %v1394 = vmul.f32 %v1388, %v1392
    %v1395 = vlaneseq
    %v1396 = vshrl.u32 %v1395, 7
    %v1397 = vsub.s32 0, %v1396
    %v1398 = vrot.slane %v1362, %v1397
    %v1399 = vadd.f32 %v1393, %v1398
    %v1400 = vadd.f32 %v1394, %v1398
    %1401 = vst.msk [vmem:[#allocation6] sm:$0xff] %vm71, %v1399
    %1402 = vst.msk [vmem:[#allocation6 + $0x8] sm:$0xff] %vm71, %v1400
    // Predicated region
    $region38: #{tpu_custom_call.1} parent=1 // pred_check
      _
    $region39: #{tpu_custom_call.1} parent=1 // pred_check_branch
      %1404 = sbr.rel (0) target = $region41
    $region40: #{tpu_custom_call.1} parent=1 // pred_region
      %s1406 = ssub.s32 256, 256
      %1407 = vsyncadd [#allocation5], %s1406
      %s1408 = sshll.u32 [#allocation6], 4
      %s1409 = int_to_ptr.vmem [resolvable:$true] %s1408
      %1414 = dma.vmem_to_hbm [thread:$0]  %s1409, 256, %s8, [#allocation5], 128, 128, 8
    $region41: #{tpu_custom_call.1} parent=1 // pred_fallthru
      _
    // Predicated region
    $region42: #{tpu_custom_call.1} parent=1 // pred_check
      _
    $region43: #{tpu_custom_call.1} parent=1 // pred_check_branch
      %1416 = sbr.rel (0) target = $region45
    $region44: #{tpu_custom_call.1} parent=1 // pred_region
      %1417 = dma.done [#allocation5], 256
    $region45: #{tpu_custom_call.1} parent=1 // pred_fallthru
      _
    %1418 = vsyncpa [#allocation4], 1
    %1419 = vsyncpa [#allocation5], 1

</llo_original>
